<compile_context>
chip_gen: v7x
topology: tpu7x:2x2x1
jax: 0.10.0
libtpu: 0.0.40
codegen_flags: <defaults>
</compile_context>

<pallas_src>
import functools

import jax
import jax.numpy as jnp
from jax.experimental import pallas as pl
from jax.experimental.pallas import tpu as pltpu


# --------------------------------------------------------------------------
# In-kernel helpers
# --------------------------------------------------------------------------
def _conv3x3_im2col(x2d, w_ref, edge_ref, *, H, W, C):
    """3x3, stride-1, pad-1 conv of one image.

    x2d:      (H*W, C) f32 value (flattened spatial, channels minor).
    w_ref:    (9*C, Cout) bf16 ref, rows ordered ((kh*3+kw)*C + ci).
    edge_ref: (H*W, 2) f32 ref; col 0 = 0 where w==0, col 1 = 0 where w==W-1.
    Returns (H*W, Cout) f32.
    """
    HW = H * W
    not_left = edge_ref[:, 0:1]     # (HW, 1)
    not_right = edge_ref[:, 1:2]    # (HW, 1)

    taps = []
    for dy in (-1, 0, 1):
        for dx in (-1, 0, 1):
            off = dy * W + dx
            if off == 0:
                t = x2d
            elif off > 0:
                # t[r] = x2d[r + off], zero past the end (bottom padding row)
                t = jnp.concatenate(
                    [x2d[off:, :], jnp.zeros((off, C), x2d.dtype)], axis=0)
            else:
                # t[r] = x2d[r + off], zero before the start (top padding row)
                t = jnp.concatenate(
                    [jnp.zeros((-off, C), x2d.dtype), x2d[:off, :]], axis=0)
            # mask taps that wrapped across a row boundary (left/right padding)
            if dx == -1:
                t = t * not_left
            elif dx == 1:
                t = t * not_right
            taps.append(t)

    # One im2col buffer, one MXU push per conv (K = 9*C), bf16 in / f32 out.
    col = jnp.concatenate(taps, axis=1).astype(jnp.bfloat16)          # (HW, 9C)
    return jnp.dot(col, w_ref[...], preferred_element_type=jnp.float32)


def _write_conv_and_stats(acc, y_ref, s_ref):
    y_ref[0] = acc
    # per-image partial BN statistics: [sum, sum of squares] per channel
    s_ref[0] = jnp.concatenate(
        [jnp.sum(acc, axis=0, keepdims=True),
         jnp.sum(acc * acc, axis=0, keepdims=True)], axis=0)


# --------------------------------------------------------------------------
# Kernels (grid = (N,), one image per step, "parallel")
# --------------------------------------------------------------------------
def _conv1_kernel(x_ref, w_ref, edge_ref, y_ref, s_ref, *, H, W, C):
    acc = _conv3x3_im2col(x_ref[0], w_ref, edge_ref, H=H, W=W, C=C)
    _write_conv_and_stats(acc, y_ref, s_ref)


def _bn_relu_conv2_kernel(y1_ref, w_ref, edge_ref, scale_ref, shift_ref,
                          y_ref, s_ref, *, H, W, C):
    # bn1 (folded scale/shift) + relu in f32, then conv2
    a = jnp.maximum(y1_ref[0] * scale_ref[...] + shift_ref[...], 0.0)
    acc = _conv3x3_im2col(a, w_ref, edge_ref, H=H, W=W, C=C)
    _write_conv_and_stats(acc, y_ref, s_ref)


def _bn_add_relu_kernel(y2_ref, res_ref, scale_ref, shift_ref, o_ref):
    # bn2 (folded) + residual add + final relu
    o_ref[0] = jnp.maximum(
        y2_ref[0] * scale_ref[...] + shift_ref[...] + res_ref[0], 0.0)


# --------------------------------------------------------------------------
# Wrapper
# --------------------------------------------------------------------------
def _fold_bn(partial_stats, gamma, beta, count, eps):
    """Combine per-image [sum, sumsq] partials into folded (scale, shift)."""
    tot = jnp.sum(partial_stats, axis=0)                    # (2, C)
    mean = tot[0] / count
    var = tot[1] / count - mean * mean                      # biased variance
    scale = gamma * jax.lax.rsqrt(var + eps)                # gamma / sqrt(var+eps)
    shift = beta - mean * scale
    C = gamma.shape[0]
    return (scale.astype(jnp.float32).reshape(1, C),
            shift.astype(jnp.float32).reshape(1, C))


def basic_block(x_nchw, params):
    """params = (w1, gamma1, beta1, w2, gamma2, beta2); conv weights (kh,kw,cin,cout)."""
    w1, g1, b1, w2, g2, b2 = params
    N, C, H, W = x_nchw.shape
    HW = H * W
    eps = 1e-5

    # --- wrapper-side layout plumbing (no padded copy, no duplicated tensor) ---
    x = jnp.transpose(x_nchw, (0, 2, 3, 1)).reshape(N, HW, C).astype(jnp.float32)
    w1f = w1.reshape(9 * C, C).astype(jnp.bfloat16)          # (9C, C) for im2col dot
    w2f = w2.reshape(9 * C, C).astype(jnp.bfloat16)
    wcol = jnp.arange(HW, dtype=jnp.int32) % W               # column-within-row index
    edge = jnp.stack([(wcol != 0), (wcol != W - 1)], axis=1).astype(jnp.float32)

    act_spec = pl.BlockSpec((1, HW, C), lambda i: (i, 0, 0))
    stat_spec = pl.BlockSpec((1, 2, C), lambda i: (i, 0, 0))
    w_spec = pl.BlockSpec((9 * C, C), lambda i: (0, 0))
    edge_spec = pl.BlockSpec((HW, 2), lambda i: (0, 0))
    vec_spec = pl.BlockSpec((1, C), lambda i: (0, 0))
    cparams = pltpu.CompilerParams(
        dimension_semantics=("parallel",),          # megacore sharding on v7x
        vmem_limit_bytes=48 * 1024 * 1024)          # explicit budget < v7x 64 MiB

    # ---- pass 1: conv1 + per-image partial BN1 stats ----
    y1, s1 = pl.pallas_call(
        functools.partial(_conv1_kernel, H=H, W=W, C=C),
        grid=(N,),
        in_specs=[act_spec, w_spec, edge_spec],
        out_specs=(act_spec, stat_spec),
        out_shape=(jax.ShapeDtypeStruct((N, HW, C), jnp.float32),
                   jax.ShapeDtypeStruct((N, 2, C), jnp.float32)),
        compiler_params=cparams,
    )(x, w1f, edge)
    scale1, shift1 = _fold_bn(s1, g1, b1, N * HW, eps)

    # ---- pass 2: bn1 + relu + conv2 + per-image partial BN2 stats ----
    y2, s2 = pl.pallas_call(
        functools.partial(_bn_relu_conv2_kernel, H=H, W=W, C=C),
        grid=(N,),
        in_specs=[act_spec, w_spec, edge_spec, vec_spec, vec_spec],
        out_specs=(act_spec, stat_spec),
        out_shape=(jax.ShapeDtypeStruct((N, HW, C), jnp.float32),
                   jax.ShapeDtypeStruct((N, 2, C), jnp.float32)),
        compiler_params=cparams,
    )(y1, w2f, edge, scale1, shift1)
    scale2, shift2 = _fold_bn(s2, g2, b2, N * HW, eps)

    # ---- pass 3: bn2 + residual add + final relu ----
    out = pl.pallas_call(
        _bn_add_relu_kernel,
        grid=(N,),
        in_specs=[act_spec, act_spec, vec_spec, vec_spec],
        out_specs=act_spec,
        out_shape=jax.ShapeDtypeStruct((N, HW, C), jnp.float32),
        compiler_params=cparams,
    )(y2, x, scale2, shift2)

    return jnp.transpose(out.reshape(N, H, W, C), (0, 3, 1, 2))     # -> NCHW


# --------------------------------------------------------------------------
# Pure-JAX reference (lax.conv) for a sanity check
# --------------------------------------------------------------------------
def _reference(x_nchw, params):
    w1, g1, b1, w2, g2, b2 = params
    eps = 1e-5

    def conv(x, w):  # x NCHW, w (kh,kw,cin,cout) -> OIHW
        w_oihw = jnp.transpose(w, (3, 2, 0, 1))
        return jax.lax.conv_general_dilated(
            x, w_oihw, window_strides=(1, 1), padding=((1, 1), (1, 1)),
            dimension_numbers=("NCHW", "OIHW", "NCHW"))

    def bn(x, g, b):
        mean = jnp.mean(x, axis=(0, 2, 3), keepdims=True)
        var = jnp.mean(x * x, axis=(0, 2, 3), keepdims=True) - mean * mean
        return (x - mean) * jax.lax.rsqrt(var + eps) * g[None, :, None, None] \
               + b[None, :, None, None]

    out = jax.nn.relu(bn(conv(x_nchw, w1), g1, b1))
    out = bn(conv(out, w2), g2, b2)
    return jax.nn.relu(out + x_nchw)


if __name__ == "__main__":
    key = jax.random.PRNGKey(0)
    k_x, k_w1, k_w2, k_g1, k_b1, k_g2, k_b2 = jax.random.split(key, 7)

    N, C, H, W = 2, 4, 16, 16          # inplanes = planes = 4, stride = 1
    x = jax.random.normal(k_x, (N, C, H, W), jnp.float32)

    std = (2.0 / (9 * C)) ** 0.5
    w1 = jax.random.normal(k_w1, (3, 3, C, C), jnp.float32) * std
    w2 = jax.random.normal(k_w2, (3, 3, C, C), jnp.float32) * std
    g1 = 1.0 + 0.1 * jax.random.normal(k_g1, (C,), jnp.float32)
    b1 = 0.1 * jax.random.normal(k_b1, (C,), jnp.float32)
    g2 = 1.0 + 0.1 * jax.random.normal(k_g2, (C,), jnp.float32)
    b2 = 0.1 * jax.random.normal(k_b2, (C,), jnp.float32)
    params = (w1, g1, b1, w2, g2, b2)

    out = jax.block_until_ready(basic_block(x, params))
    ref = jax.block_until_ready(_reference(x, params))

    assert out.shape == (N, C, H, W)
    # bf16 MXU inputs (f32 accumulate / BN) -> allow a slightly loose tolerance
    assert jnp.allclose(out, ref, rtol=2e-2, atol=2e-2), \
        f"max abs err {jnp.max(jnp.abs(out - ref))}"
    print("KERNEL_OK")
</pallas_src>

<mosaic_0001>
module attributes {stable_mosaic.version = 11 : i64} {
  func.func @_conv1_kernel(%arg0: i32, %arg1: memref<1x256x4xf32, #tpu.memory_space<vmem>>, %arg2: memref<36x4xbf16, #tpu.memory_space<vmem>>, %arg3: memref<256x2xf32, #tpu.memory_space<vmem>>, %arg4: memref<1x256x4xf32, #tpu.memory_space<vmem>>, %arg5: memref<1x2x4xf32, #tpu.memory_space<vmem>>) attributes {dimension_semantics = [#tpu.dimension_semantics<parallel>], iteration_bounds = array<i64: 2>, scalar_prefetch = 0 : i64, scratch_operands = 0 : i64, tpu.core_type = #tpu.core_type<tc>, window_params = [{transform_indices = @transform_0, window_bounds = array<i64: 1, 256, 4>}, {pipeline_mode = #tpu.pipeline_mode<synchronous>, transform_indices = @transform_1, window_bounds = array<i64: 36, 4>}, {pipeline_mode = #tpu.pipeline_mode<synchronous>, transform_indices = @transform_2, window_bounds = array<i64: 256, 2>}, {transform_indices = @transform_3, window_bounds = array<i64: 1, 256, 4>}, {transform_indices = @transform_4, window_bounds = array<i64: 1, 2, 4>}]} {
    %c0 = arith.constant 0 : index
    %c0_0 = arith.constant 0 : index
    %c0_1 = arith.constant 0 : index
    %0 = vector.load %arg1[%c0, %c0_0, %c0_1] : memref<1x256x4xf32, #tpu.memory_space<vmem>>, vector<1x256x4xf32>
    %1 = vector.shape_cast %0 : vector<1x256x4xf32> to vector<256x4xf32>
    %c0_2 = arith.constant 0 : index
    %c0_3 = arith.constant 0 : index
    %2 = vector.load %arg3[%c0_2, %c0_3] : memref<256x2xf32, #tpu.memory_space<vmem>>, vector<256x1xf32>
    %c0_4 = arith.constant 0 : index
    %c1 = arith.constant 1 : index
    %3 = vector.load %arg3[%c0_4, %c1] : memref<256x2xf32, #tpu.memory_space<vmem>>, vector<256x1xf32>
    %cst = arith.constant 0.000000e+00 : f32
    %4 = vector.broadcast %cst : f32 to vector<17x4xf32>
    %5 = vector.extract_strided_slice %1 {offsets = [0, 0], sizes = [239, 4], strides = [1, 1]} : vector<256x4xf32> to vector<239x4xf32>
    %6 = tpu.concatenate %4, %5 in 0 : vector<17x4xf32>, vector<239x4xf32> -> vector<256x4xf32>
    %7 = vector.broadcast %2 : vector<256x1xf32> to vector<256x4xf32>
    %8 = arith.mulf %6, %7 : vector<256x4xf32>
    %cst_5 = arith.constant 0.000000e+00 : f32
    %9 = vector.broadcast %cst_5 : f32 to vector<16x4xf32>
    %10 = vector.extract_strided_slice %1 {offsets = [0, 0], sizes = [240, 4], strides = [1, 1]} : vector<256x4xf32> to vector<240x4xf32>
    %11 = tpu.concatenate %9, %10 in 0 : vector<16x4xf32>, vector<240x4xf32> -> vector<256x4xf32>
    %cst_6 = arith.constant 0.000000e+00 : f32
    %12 = vector.broadcast %cst_6 : f32 to vector<15x4xf32>
    %13 = vector.extract_strided_slice %1 {offsets = [0, 0], sizes = [241, 4], strides = [1, 1]} : vector<256x4xf32> to vector<241x4xf32>
    %14 = tpu.concatenate %12, %13 in 0 : vector<15x4xf32>, vector<241x4xf32> -> vector<256x4xf32>
    %15 = vector.broadcast %3 : vector<256x1xf32> to vector<256x4xf32>
    %16 = arith.mulf %14, %15 : vector<256x4xf32>
    %cst_7 = arith.constant 0.000000e+00 : f32
    %17 = vector.broadcast %cst_7 : f32 to vector<1x4xf32>
    %18 = vector.extract_strided_slice %1 {offsets = [0, 0], sizes = [255, 4], strides = [1, 1]} : vector<256x4xf32> to vector<255x4xf32>
    %19 = tpu.concatenate %17, %18 in 0 : vector<1x4xf32>, vector<255x4xf32> -> vector<256x4xf32>
    %20 = vector.broadcast %2 : vector<256x1xf32> to vector<256x4xf32>
    %21 = arith.mulf %19, %20 : vector<256x4xf32>
    %22 = vector.extract_strided_slice %1 {offsets = [1, 0], sizes = [255, 4], strides = [1, 1]} : vector<256x4xf32> to vector<255x4xf32>
    %cst_8 = arith.constant 0.000000e+00 : f32
    %23 = vector.broadcast %cst_8 : f32 to vector<1x4xf32>
    %24 = tpu.concatenate %22, %23 in 0 : vector<255x4xf32>, vector<1x4xf32> -> vector<256x4xf32>
    %25 = vector.broadcast %3 : vector<256x1xf32> to vector<256x4xf32>
    %26 = arith.mulf %24, %25 : vector<256x4xf32>
    %27 = vector.extract_strided_slice %1 {offsets = [15, 0], sizes = [241, 4], strides = [1, 1]} : vector<256x4xf32> to vector<241x4xf32>
    %cst_9 = arith.constant 0.000000e+00 : f32
    %28 = vector.broadcast %cst_9 : f32 to vector<15x4xf32>
    %29 = tpu.concatenate %27, %28 in 0 : vector<241x4xf32>, vector<15x4xf32> -> vector<256x4xf32>
    %30 = vector.broadcast %2 : vector<256x1xf32> to vector<256x4xf32>
    %31 = arith.mulf %29, %30 : vector<256x4xf32>
    %32 = vector.extract_strided_slice %1 {offsets = [16, 0], sizes = [240, 4], strides = [1, 1]} : vector<256x4xf32> to vector<240x4xf32>
    %cst_10 = arith.constant 0.000000e+00 : f32
    %33 = vector.broadcast %cst_10 : f32 to vector<16x4xf32>
    %34 = tpu.concatenate %32, %33 in 0 : vector<240x4xf32>, vector<16x4xf32> -> vector<256x4xf32>
    %35 = vector.extract_strided_slice %1 {offsets = [17, 0], sizes = [239, 4], strides = [1, 1]} : vector<256x4xf32> to vector<239x4xf32>
    %cst_11 = arith.constant 0.000000e+00 : f32
    %36 = vector.broadcast %cst_11 : f32 to vector<17x4xf32>
    %37 = tpu.concatenate %35, %36 in 0 : vector<239x4xf32>, vector<17x4xf32> -> vector<256x4xf32>
    %38 = vector.broadcast %3 : vector<256x1xf32> to vector<256x4xf32>
    %39 = arith.mulf %37, %38 : vector<256x4xf32>
    %40 = tpu.concatenate %8, %11, %16, %21, %1, %26, %31, %34, %39 in 1 : vector<256x4xf32>, vector<256x4xf32>, vector<256x4xf32>, vector<256x4xf32>, vector<256x4xf32>, vector<256x4xf32>, vector<256x4xf32>, vector<256x4xf32>, vector<256x4xf32> -> vector<256x36xf32>
    %41 = arith.truncf %40 : vector<256x36xf32> to vector<256x36xbf16>
    %c0_12 = arith.constant 0 : index
    %c0_13 = arith.constant 0 : index
    %42 = vector.load %arg2[%c0_12, %c0_13] : memref<36x4xbf16, #tpu.memory_space<vmem>>, vector<36x4xbf16>
    %cst_14 = arith.constant dense<0.000000e+00> : vector<256x4xf32>
    %43 = tpu.matmul %41, %42, %cst_14 {dimension_numbers = #tpu.dot_dimension_numbers<[1], [0], [0], [1], [0, 0, 1, 1], [], []>} : vector<256x36xbf16>, vector<36x4xbf16>, vector<256x4xf32> -> vector<256x4xf32>
    %c0_15 = arith.constant 0 : index
    %c0_16 = arith.constant 0 : index
    %c0_17 = arith.constant 0 : index
    %44 = vector.load %arg4[%c0_15, %c0_16, %c0_17] : memref<1x256x4xf32, #tpu.memory_space<vmem>>, vector<1x256x4xf32>
    %45 = vector.shape_cast %44 : vector<1x256x4xf32> to vector<256x4xf32>
    %46 = vector.shape_cast %43 : vector<256x4xf32> to vector<1x256x4xf32>
    tpu.vector_store %arg4[%c0_15, %c0_16, %c0_17], %46 {strides = array<i32>} : memref<1x256x4xf32, #tpu.memory_space<vmem>>, vector<1x256x4xf32>,
    %cst_18 = arith.constant dense<0.000000e+00> : vector<4xf32>
    %47 = vector.multi_reduction <add>, %43, %cst_18 [0] : vector<256x4xf32> to vector<4xf32>
    %48 = vector.shape_cast %47 : vector<4xf32> to vector<1x4xf32>
    %49 = arith.mulf %43, %43 : vector<256x4xf32>
    %cst_19 = arith.constant dense<0.000000e+00> : vector<4xf32>
    %50 = vector.multi_reduction <add>, %49, %cst_19 [0] : vector<256x4xf32> to vector<4xf32>
    %51 = vector.shape_cast %50 : vector<4xf32> to vector<1x4xf32>
    %52 = tpu.concatenate %48, %51 in 0 : vector<1x4xf32>, vector<1x4xf32> -> vector<2x4xf32>
    %c0_20 = arith.constant 0 : index
    %c0_21 = arith.constant 0 : index
    %c0_22 = arith.constant 0 : index
    %53 = vector.load %arg5[%c0_20, %c0_21, %c0_22] : memref<1x2x4xf32, #tpu.memory_space<vmem>>, vector<1x2x4xf32>
    %54 = vector.shape_cast %53 : vector<1x2x4xf32> to vector<2x4xf32>
    %55 = vector.shape_cast %52 : vector<2x4xf32> to vector<1x2x4xf32>
    tpu.vector_store %arg5[%c0_20, %c0_21, %c0_22], %55 {strides = array<i32>} : memref<1x2x4xf32, #tpu.memory_space<vmem>>, vector<1x2x4xf32>,
    return
  }
  func.func @transform_0(%arg0: i32) -> (i32, i32, i32) {
    %c0_i32 = arith.constant 0 : i32
    %c0_i32_0 = arith.constant 0 : i32
    %c0_i32_1 = arith.constant 0 : i32
    return %arg0, %c0_i32, %c0_i32_0 : i32, i32, i32
  }
  func.func @transform_1(%arg0: i32) -> (i32, i32) {
    %c0_i32 = arith.constant 0 : i32
    %c0_i32_0 = arith.constant 0 : i32
    %c0_i32_1 = arith.constant 0 : i32
    return %c0_i32, %c0_i32_0 : i32, i32
  }
  func.func @transform_2(%arg0: i32) -> (i32, i32) {
    %c0_i32 = arith.constant 0 : i32
    %c0_i32_0 = arith.constant 0 : i32
    %c0_i32_1 = arith.constant 0 : i32
    return %c0_i32, %c0_i32_0 : i32, i32
  }
  func.func @transform_3(%arg0: i32) -> (i32, i32, i32) {
    %c0_i32 = arith.constant 0 : i32
    %c0_i32_0 = arith.constant 0 : i32
    %c0_i32_1 = arith.constant 0 : i32
    return %arg0, %c0_i32, %c0_i32_0 : i32, i32, i32
  }
  func.func @transform_4(%arg0: i32) -> (i32, i32, i32) {
    %c0_i32 = arith.constant 0 : i32
    %c0_i32_0 = arith.constant 0 : i32
    %c0_i32_1 = arith.constant 0 : i32
    return %arg0, %c0_i32, %c0_i32_0 : i32, i32, i32
  }
}

</mosaic_0001>

<llo_original>
// kernel: tpu_custom_call.1
$region0: #{tpu_custom_call.1}
  #allocation0 [shape = 'u32[]', space=smem, size = 0x4, offset = 0x4, fixed_abs, tag = 'smem constant byte address 0x4 - core index']
  #allocation1 [shape = 'u32[144,128]{1,0:T(1,128)}', space=vmem, size = 0x12000, scoped, tag = 'internal scratch']
  %s0 = inlined_call_operand.vmem [shape: f32[2,256,4], index: 0, kind: input, shape index: {}]
  %s1 = inlined_call_operand.vmem [shape: bf16[36,4], index: 1, kind: input, shape index: {}]
  %s2 = inlined_call_operand.vmem [shape: f32[256,2], index: 2, kind: input, shape index: {}]
  %s3 = inlined_call_operand.vmem [shape: f32[2,256,4], index: 3, kind: output, shape index: {0}]
  %s4 = inlined_call_operand.hbm [shape: f32[2,2,4], index: 4, kind: output, shape index: {1}]
  %5 = xla_tuple %s3, %s4
  %s6 = sld [smem:[#allocation0]]
  $region53: #{tpu_custom_call.1} parent=0
    _
  %s8 = ssub.s32 1, %s6
  %s9 = scalar_select 0, %s8, %s6
  $region1: #{tpu_custom_call.1} parent=0
    #allocation2 [shape = 'u8[2048]{0}', space=vmem, size = 0x800, scoped, tag = 'output window, operand 1']
    #allocation3 [shape = 's32[2]{0}', space=sflag, size = 0x8, scoped, tag = 'scoped memory for tpu_custom_call.1']
    %10 = vsyncpa [#allocation3], 0
    %s11 = scalar_lea.sflag [#allocation3], 1
    %12 = vsyncpa %s11, 0
    loop: start=0, step=1, limit=4
    $region2: #{tpu_custom_call.1} parent=1 // loop_pre_header
      _
    $region3: #{tpu_custom_call.1} parent=1 // loop_header
      %s14 = sphi 0, %s18
      %p15 = scmp.ge.s32.totalorder %s14, 4
      %s24 = sphi 0, %s26
      %s27 = sphi 0, %s24
      %s28 = sphi 0, %s27
      %s44 = sphi 0, %s28
      %s48 = sphi 0, %s48
      %s50 = sphi 0, %s48
      %s51 = sphi 0, %s50
      %s65 = sphi 0, %s51
      %s69 = sphi 0, %s69
      %s71 = sphi 0, %s69
      %s72 = sphi 0, %s71
      %s86 = sphi 0, %s72
      %s92 = sphi 0, %s94
      %s95 = sphi 0, %s92
      %s96 = sphi 0, %s95
      %s112 = sphi 0, %s96
      %s118 = sphi 0, %s120
      %s121 = sphi 0, %s118
      %s122 = sphi 0, %s121
      %s138 = sphi 0, %s122
    $region4: #{tpu_custom_call.1} parent=1 // loop_header_branch
      %17 = sbr.rel (%p15) target = $region8
    $region5: #{tpu_custom_call.1} parent=1 // loop_body
      %s19 = ssub.s32 %s14, 1
      %s20 = ssub.s32 %s14, 2
      %s21 = sadd.s32 %s14, 1
      %s22 = ssub.s32 %s14, %s21
      %p23 = scmp.eq.s32.totalorder %s22, 0
      %s25 = sadd.s32 %s24, 1
      %s26 = scalar_select %p23, %s24, %s25
      %p29 = pneg %p23
      %p30 = scmp.eq.s32.totalorder %s14, 1
      %p31 = por %p29, %p30
      %p32 = scmp.ne.s32.totalorder %s24, %s27
      %p33 = scmp.eq.s32.totalorder %s14, 0
      %p34 = por %p32, %p33
      %p35 = scmp.ne.s32.totalorder %s24, %s27
      %p36 = scmp.eq.s32.totalorder %s19, 1
      %p37 = por %p35, %p36
      %p38 = scmp.ne.s32.totalorder %s27, %s28
      %p39 = scmp.eq.s32.totalorder %s19, 0
      %p40 = por %p38, %p39
      %p41 = scmp.ne.s32.totalorder %s27, %s28
      %p42 = scmp.eq.s32.totalorder %s20, 1
      %p43 = por %p41, %p42
      %p45 = scmp.ne.s32.totalorder %s28, %s44
      %p46 = scmp.eq.s32.totalorder %s20, 0
      %p47 = por %p45, %p46
      %s49 = sadd.s32 %s48, 1
      %p52 = scmp.eq.s32.totalorder %s14, 1
      %p53 = scmp.ne.s32.totalorder %s48, %s50
      %p54 = scmp.eq.s32.totalorder %s14, 0
      %p55 = por %p53, %p54
      %p56 = scmp.ne.s32.totalorder %s48, %s50
      %p57 = scmp.eq.s32.totalorder %s19, 1
      %p58 = por %p56, %p57
      %p59 = scmp.ne.s32.totalorder %s50, %s51
      %p60 = scmp.eq.s32.totalorder %s19, 0
      %p61 = por %p59, %p60
      %p62 = scmp.ne.s32.totalorder %s50, %s51
      %p63 = scmp.eq.s32.totalorder %s20, 1
      %p64 = por %p62, %p63
      %p66 = scmp.ne.s32.totalorder %s51, %s65
      %p67 = scmp.eq.s32.totalorder %s20, 0
      %p68 = por %p66, %p67
      %s70 = sadd.s32 %s69, 1
      %p73 = scmp.eq.s32.totalorder %s14, 1
      %p74 = scmp.ne.s32.totalorder %s69, %s71
      %p75 = scmp.eq.s32.totalorder %s14, 0
      %p76 = por %p74, %p75
      %p77 = scmp.ne.s32.totalorder %s69, %s71
      %p78 = scmp.eq.s32.totalorder %s19, 1
      %p79 = por %p77, %p78
      %p80 = scmp.ne.s32.totalorder %s71, %s72
      %p81 = scmp.eq.s32.totalorder %s19, 0
      %p82 = por %p80, %p81
      %p83 = scmp.ne.s32.totalorder %s71, %s72
      %p84 = scmp.eq.s32.totalorder %s20, 1
      %p85 = por %p83, %p84
      %p87 = scmp.ne.s32.totalorder %s72, %s86
      %p88 = scmp.eq.s32.totalorder %s20, 0
      %p89 = por %p87, %p88
      %s90 = ssub.s32 %s14, %s21
      %p91 = scmp.eq.s32.totalorder %s90, 0
      %s93 = sadd.s32 %s92, 1
      %s94 = scalar_select %p91, %s92, %s93
      %p97 = pneg %p91
      %p98 = scmp.eq.s32.totalorder %s14, 1
      %p99 = por %p97, %p98
      %p100 = scmp.ne.s32.totalorder %s92, %s95
      %p101 = scmp.eq.s32.totalorder %s14, 0
      %p102 = por %p100, %p101
      %p103 = scmp.ne.s32.totalorder %s92, %s95
      %p104 = scmp.eq.s32.totalorder %s19, 1
      %p105 = por %p103, %p104
      %p106 = scmp.ne.s32.totalorder %s95, %s96
      %p107 = scmp.eq.s32.totalorder %s19, 0
      %p108 = por %p106, %p107
      %p109 = scmp.ne.s32.totalorder %s95, %s96
      %p110 = scmp.eq.s32.totalorder %s20, 1
      %p111 = por %p109, %p110
      %p113 = scmp.ne.s32.totalorder %s96, %s112
      %p114 = scmp.eq.s32.totalorder %s20, 0
      %p115 = por %p113, %p114
      %s116 = ssub.s32 %s14, %s21
      %p117 = scmp.eq.s32.totalorder %s116, 0
      %s119 = sadd.s32 %s118, 1
      %s120 = scalar_select %p117, %s118, %s119
      %p123 = pneg %p117
      %p124 = scmp.eq.s32.totalorder %s14, 1
      %p125 = por %p123, %p124
      %p126 = scmp.ne.s32.totalorder %s118, %s121
      %p127 = scmp.eq.s32.totalorder %s14, 0
      %p128 = por %p126, %p127
      %p129 = scmp.ne.s32.totalorder %s118, %s121
      %p130 = scmp.eq.s32.totalorder %s19, 1
      %p131 = por %p129, %p130
      %p132 = scmp.ne.s32.totalorder %s121, %s122
      %p133 = scmp.eq.s32.totalorder %s19, 0
      %p134 = por %p132, %p133
      %p135 = scmp.ne.s32.totalorder %s121, %s122
      %p136 = scmp.eq.s32.totalorder %s20, 1
      %p137 = por %p135, %p136
      %p139 = scmp.ne.s32.totalorder %s122, %s138
      %p140 = scmp.eq.s32.totalorder %s20, 0
      %p141 = por %p139, %p140
      %p142 = scmp.le.s32.totalorder 1, %s14
      %p143 = scmp.lt.s32.totalorder %s14, 3
      %p144 = pnand %p142, %p143
      %p145 = pneg %p144
      // Predicated region
      $region9: #{tpu_custom_call.1} parent=5 // pred_check
        _
      $region10: #{tpu_custom_call.1} parent=5 // pred_check_branch
        %147 = sbr.rel (%p144) target = $region12
      $region11: #{tpu_custom_call.1} parent=5 // pred_region
        %s148 = ssub.s32 %s14, 1
        // Predicated region
        $region13: #{tpu_custom_call.1} parent=11 // pred_check
          %p149 = pneg %p61
        $region14: #{tpu_custom_call.1} parent=11 // pred_check_branch
          %151 = sbr.rel (%p149) target = $region16
        $region15: #{tpu_custom_call.1} parent=11 // pred_region
          _
        $region16: #{tpu_custom_call.1} parent=11 // pred_fallthru
          _
        // Predicated region
        $region17: #{tpu_custom_call.1} parent=11 // pred_check
          %p152 = pneg %p82
        $region18: #{tpu_custom_call.1} parent=11 // pred_check_branch
          %154 = sbr.rel (%p152) target = $region20
        $region19: #{tpu_custom_call.1} parent=11 // pred_region
          _
        $region20: #{tpu_custom_call.1} parent=11 // pred_fallthru
          _
      $region12: #{tpu_custom_call.1} parent=5 // pred_fallthru
        _
      %p155 = scmp.lt.s32.totalorder %s14, 2
      // Predicated region
      $region21: #{tpu_custom_call.1} parent=5 // pred_check
        %p156 = pneg %p155
      $region22: #{tpu_custom_call.1} parent=5 // pred_check_branch
        %158 = sbr.rel (%p156) target = $region24
      $region23: #{tpu_custom_call.1} parent=5 // pred_region
        // Predicated region
        $region25: #{tpu_custom_call.1} parent=23 // pred_check
          %p159 = pneg %p34
        $region26: #{tpu_custom_call.1} parent=23 // pred_check_branch
          %161 = sbr.rel (%p159) target = $region28
        $region27: #{tpu_custom_call.1} parent=23 // pred_region
          %p162 = scmp.lt.s32.totalorder %s14, 1
          %s163 = scalar_select %p162, %s14, 1
          %s164 = smul.addr %s163, 32
          %s165 = smul.addr %s164, 8
          %s166 = scalar_lea.vmem %s0, %s165
        $region28: #{tpu_custom_call.1} parent=23 // pred_fallthru
          _
      $region24: #{tpu_custom_call.1} parent=5 // pred_fallthru
        _
      %p167 = scmp.le.s32.totalorder 1, %s14
      %p168 = scmp.lt.s32.totalorder %s14, 3
      %p169 = pnand %p167, %p168
      %p170 = pneg %p169
      // Predicated region
      $region29: #{tpu_custom_call.1} parent=5 // pred_check
        _
      $region30: #{tpu_custom_call.1} parent=5 // pred_check_branch
        %172 = sbr.rel (%p169) target = $region32
      $region31: #{tpu_custom_call.1} parent=5 // pred_region
        %s173 = ssub.s32 %s14, 1
        %p174 = scmp.lt.s32.totalorder %s19, 1
        %s175 = scalar_select %p174, %s19, 1
        %s176 = smul.addr %s175, 32
        %s177 = smul.addr %s176, 8
        %s178 = scalar_lea.vmem %s0, %s177
        %p179 = pneg %p40
        %p180 = pneg %p37
        %p181 = pneg %p61
        %p182 = pneg %p58
        %p183 = pneg %p82
        %p184 = pneg %p79
        %p185 = pneg %p108
        %p186 = pneg %p105
        %p187 = scmp.lt.s32.totalorder %s19, 1
        %s188 = scalar_select %p187, %s19, 1
        %s189 = smul.addr %s188, 32
        %s190 = smul.addr %s189, 8
        %s191 = scalar_lea.vmem %s3, %s190
        %p192 = pneg %p134
        %p193 = pneg %p131
        %s194 = sand.u32 %s121, 1
        %s195 = scalar_lea.sflag [#allocation3], %s194
        %s196 = sand.u32 %s121, 1
        %s197 = smul.addr %s196, 2
        %s198 = scalar_lea.vmem [#allocation2], %s197
        %p199 = scmp.lt.s32.totalorder %s19, 1
        %s200 = scalar_select %p199, %s19, 1
        %s201 = smul.addr %s200, 32
        %s202 = smul.addr %s201, 8
        %s203 = scalar_lea.vmem %s0, %s202
        %p204 = scmp.lt.s32.totalorder %s19, 1
        %s205 = scalar_select %p204, %s19, 1
        %s206 = smul.addr %s205, 32
        %s207 = smul.addr %s206, 8
        %s208 = scalar_lea.vmem %s3, %s207
        %v210 = vld [vmem:[%s203] sm:$0xff]
        %v211 = vld [vmem:[%s203 + $0x8] sm:$0xff]
        %v212 = vld [vmem:[%s203 + $0x10] sm:$0xff]
        %v213 = vld [vmem:[%s203 + $0x18] sm:$0xff]
        %v214 = vld [vmem:[%s203 + $0x20] sm:$0xff]
        %v215 = vld [vmem:[%s203 + $0x28] sm:$0xff]
        %v216 = vld [vmem:[%s203 + $0x30] sm:$0xff]
        %v217 = vld [vmem:[%s203 + $0x38] sm:$0xff]
        %v218 = vld [vmem:[%s203 + $0x40] sm:$0xff]
        %v219 = vld [vmem:[%s203 + $0x48] sm:$0xff]
        %v220 = vld [vmem:[%s203 + $0x50] sm:$0xff]
        %v221 = vld [vmem:[%s203 + $0x58] sm:$0xff]
        %v222 = vld [vmem:[%s203 + $0x60] sm:$0xff]
        %v223 = vld [vmem:[%s203 + $0x68] sm:$0xff]
        %v224 = vld [vmem:[%s203 + $0x70] sm:$0xff]
        %v225 = vld [vmem:[%s203 + $0x78] sm:$0xff]
        %v226 = vld [vmem:[%s203 + $0x80] sm:$0xff]
        %v227 = vld [vmem:[%s203 + $0x88] sm:$0xff]
        %v228 = vld [vmem:[%s203 + $0x90] sm:$0xff]
        %v229 = vld [vmem:[%s203 + $0x98] sm:$0xff]
        %v230 = vld [vmem:[%s203 + $0xa0] sm:$0xff]
        %v231 = vld [vmem:[%s203 + $0xa8] sm:$0xff]
        %v232 = vld [vmem:[%s203 + $0xb0] sm:$0xff]
        %v233 = vld [vmem:[%s203 + $0xb8] sm:$0xff]
        %v234 = vld [vmem:[%s203 + $0xc0] sm:$0xff]
        %v235 = vld [vmem:[%s203 + $0xc8] sm:$0xff]
        %v236 = vld [vmem:[%s203 + $0xd0] sm:$0xff]
        %v237 = vld [vmem:[%s203 + $0xd8] sm:$0xff]
        %v238 = vld [vmem:[%s203 + $0xe0] sm:$0xff]
        %v239 = vld [vmem:[%s203 + $0xe8] sm:$0xff]
        %v240 = vld [vmem:[%s203 + $0xf0] sm:$0xff]
        %v241 = vld [vmem:[%s203 + $0xf8] sm:$0xff]
        %v242 = vld [vmem:[%s2] sm:$0xff]
        %v243 = vld [vmem:[%s2 + $0x8] sm:$0xff]
        %v244 = vld [vmem:[%s2 + $0x10] sm:$0xff]
        %v245 = vld [vmem:[%s2 + $0x18] sm:$0xff]
        %v246 = vld [vmem:[%s2 + $0x20] sm:$0xff]
        %v247 = vld [vmem:[%s2 + $0x28] sm:$0xff]
        %v248 = vld [vmem:[%s2 + $0x30] sm:$0xff]
        %v249 = vld [vmem:[%s2 + $0x38] sm:$0xff]
        %v250 = vld [vmem:[%s2 + $0x40] sm:$0xff]
        %v251 = vld [vmem:[%s2 + $0x48] sm:$0xff]
        %v252 = vld [vmem:[%s2 + $0x50] sm:$0xff]
        %v253 = vld [vmem:[%s2 + $0x58] sm:$0xff]
        %v254 = vld [vmem:[%s2 + $0x60] sm:$0xff]
        %v255 = vld [vmem:[%s2 + $0x68] sm:$0xff]
        %v256 = vld [vmem:[%s2 + $0x70] sm:$0xff]
        %v257 = vld [vmem:[%s2 + $0x78] sm:$0xff]
        %v258 = vld [vmem:[%s2 + $0x80] sm:$0xff]
        %v259 = vld [vmem:[%s2 + $0x88] sm:$0xff]
        %v260 = vld [vmem:[%s2 + $0x90] sm:$0xff]
        %v261 = vld [vmem:[%s2 + $0x98] sm:$0xff]
        %v262 = vld [vmem:[%s2 + $0xa0] sm:$0xff]
        %v263 = vld [vmem:[%s2 + $0xa8] sm:$0xff]
        %v264 = vld [vmem:[%s2 + $0xb0] sm:$0xff]
        %v265 = vld [vmem:[%s2 + $0xb8] sm:$0xff]
        %v266 = vld [vmem:[%s2 + $0xc0] sm:$0xff]
        %v267 = vld [vmem:[%s2 + $0xc8] sm:$0xff]
        %v268 = vld [vmem:[%s2 + $0xd0] sm:$0xff]
        %v269 = vld [vmem:[%s2 + $0xd8] sm:$0xff]
        %v270 = vld [vmem:[%s2 + $0xe0] sm:$0xff]
        %v271 = vld [vmem:[%s2 + $0xe8] sm:$0xff]
        %v272 = vld [vmem:[%s2 + $0xf0] sm:$0xff]
        %v273 = vld [vmem:[%s2 + $0xf8] sm:$0xff]
        %vm304 = vcmask 1040384
        %v305 = vrot.slane %v210, 7
        %v306 = vrot.slane %v211, 7
        %v307 = vsel %vm304, %v305, %v306
        %v308 = vrot.slane %v212, 7
        %v309 = vsel %vm304, %v306, %v308
        %v310 = vrot.slane %v213, 7
        %v311 = vsel %vm304, %v308, %v310
        %v312 = vrot.slane %v214, 7
        %v313 = vsel %vm304, %v310, %v312
        %v314 = vrot.slane %v215, 7
        %v315 = vsel %vm304, %v312, %v314
        %v316 = vrot.slane %v216, 7
        %v317 = vsel %vm304, %v314, %v316
        %v318 = vrot.slane %v217, 7
        %v319 = vsel %vm304, %v316, %v318
        %v320 = vrot.slane %v218, 7
        %v321 = vsel %vm304, %v318, %v320
        %v322 = vrot.slane %v219, 7
        %v323 = vsel %vm304, %v320, %v322
        %v324 = vrot.slane %v220, 7
        %v325 = vsel %vm304, %v322, %v324
        %v326 = vrot.slane %v221, 7
        %v327 = vsel %vm304, %v324, %v326
        %v328 = vrot.slane %v222, 7
        %v329 = vsel %vm304, %v326, %v328
        %v330 = vrot.slane %v223, 7
        %v331 = vsel %vm304, %v328, %v330
        %v332 = vrot.slane %v224, 7
        %v333 = vsel %vm304, %v330, %v332
        %v334 = vrot.slane %v225, 7
        %v335 = vsel %vm304, %v332, %v334
        %v336 = vrot.slane %v226, 7
        %v337 = vsel %vm304, %v334, %v336
        %v338 = vrot.slane %v227, 7
        %v339 = vsel %vm304, %v336, %v338
        %v340 = vrot.slane %v228, 7
        %v341 = vsel %vm304, %v338, %v340
        %v342 = vrot.slane %v229, 7
        %v343 = vsel %vm304, %v340, %v342
        %v344 = vrot.slane %v230, 7
        %v345 = vsel %vm304, %v342, %v344
        %v346 = vrot.slane %v231, 7
        %v347 = vsel %vm304, %v344, %v346
        %v348 = vrot.slane %v232, 7
        %v349 = vsel %vm304, %v346, %v348
        %v350 = vrot.slane %v233, 7
        %v351 = vsel %vm304, %v348, %v350
        %v352 = vrot.slane %v234, 7
        %v353 = vsel %vm304, %v350, %v352
        %v354 = vrot.slane %v235, 7
        %v355 = vsel %vm304, %v352, %v354
        %v356 = vrot.slane %v236, 7
        %v357 = vsel %vm304, %v354, %v356
        %v358 = vrot.slane %v237, 7
        %v359 = vsel %vm304, %v356, %v358
        %v360 = vrot.slane %v238, 7
        %v361 = vsel %vm304, %v358, %v360
        %v362 = vrot.slane %v239, 7
        %v363 = vsel %vm304, %v360, %v362
        %v394 = vsel %vm304, 0.0, %v305
        %396 = vset.pattern.permute.xlu0 0
        %397 = vperm.xlu0 %396, %v242
        %v398 = vpop.permute.xlu0 %397
        %401 = vset.pattern.permute.xlu0 0
        %402 = vperm.xlu0 %401, %v243
        %v403 = vpop.permute.xlu0 %402
        %406 = vset.pattern.permute.xlu0 0
        %407 = vperm.xlu0 %406, %v244
        %v408 = vpop.permute.xlu0 %407
        %411 = vset.pattern.permute.xlu0 0
        %412 = vperm.xlu0 %411, %v245
        %v413 = vpop.permute.xlu0 %412
        %416 = vset.pattern.permute.xlu0 0
        %417 = vperm.xlu0 %416, %v246
        %v418 = vpop.permute.xlu0 %417
        %421 = vset.pattern.permute.xlu0 0
        %422 = vperm.xlu0 %421, %v247
        %v423 = vpop.permute.xlu0 %422
        %426 = vset.pattern.permute.xlu0 0
        %427 = vperm.xlu0 %426, %v248
        %v428 = vpop.permute.xlu0 %427
        %431 = vset.pattern.permute.xlu0 0
        %432 = vperm.xlu0 %431, %v249
        %v433 = vpop.permute.xlu0 %432
        %436 = vset.pattern.permute.xlu0 0
        %437 = vperm.xlu0 %436, %v250
        %v438 = vpop.permute.xlu0 %437
        %441 = vset.pattern.permute.xlu0 0
        %442 = vperm.xlu0 %441, %v251
        %v443 = vpop.permute.xlu0 %442
        %446 = vset.pattern.permute.xlu0 0
        %447 = vperm.xlu0 %446, %v252
        %v448 = vpop.permute.xlu0 %447
        %451 = vset.pattern.permute.xlu0 0
        %452 = vperm.xlu0 %451, %v253
        %v453 = vpop.permute.xlu0 %452
        %456 = vset.pattern.permute.xlu0 0
        %457 = vperm.xlu0 %456, %v254
        %v458 = vpop.permute.xlu0 %457
        %461 = vset.pattern.permute.xlu0 0
        %462 = vperm.xlu0 %461, %v255
        %v463 = vpop.permute.xlu0 %462
        %466 = vset.pattern.permute.xlu0 0
        %467 = vperm.xlu0 %466, %v256
        %v468 = vpop.permute.xlu0 %467
        %471 = vset.pattern.permute.xlu0 0
        %472 = vperm.xlu0 %471, %v257
        %v473 = vpop.permute.xlu0 %472
        %476 = vset.pattern.permute.xlu0 0
        %477 = vperm.xlu0 %476, %v258
        %v478 = vpop.permute.xlu0 %477
        %481 = vset.pattern.permute.xlu0 0
        %482 = vperm.xlu0 %481, %v259
        %v483 = vpop.permute.xlu0 %482
        %486 = vset.pattern.permute.xlu0 0
        %487 = vperm.xlu0 %486, %v260
        %v488 = vpop.permute.xlu0 %487
        %491 = vset.pattern.permute.xlu0 0
        %492 = vperm.xlu0 %491, %v261
        %v493 = vpop.permute.xlu0 %492
        %496 = vset.pattern.permute.xlu0 0
        %497 = vperm.xlu0 %496, %v262
        %v498 = vpop.permute.xlu0 %497
        %501 = vset.pattern.permute.xlu0 0
        %502 = vperm.xlu0 %501, %v263
        %v503 = vpop.permute.xlu0 %502
        %506 = vset.pattern.permute.xlu0 0
        %507 = vperm.xlu0 %506, %v264
        %v508 = vpop.permute.xlu0 %507
        %511 = vset.pattern.permute.xlu0 0
        %512 = vperm.xlu0 %511, %v265
        %v513 = vpop.permute.xlu0 %512
        %516 = vset.pattern.permute.xlu0 0
        %517 = vperm.xlu0 %516, %v266
        %v518 = vpop.permute.xlu0 %517
        %521 = vset.pattern.permute.xlu0 0
        %522 = vperm.xlu0 %521, %v267
        %v523 = vpop.permute.xlu0 %522
        %526 = vset.pattern.permute.xlu0 0
        %527 = vperm.xlu0 %526, %v268
        %v528 = vpop.permute.xlu0 %527
        %531 = vset.pattern.permute.xlu0 0
        %532 = vperm.xlu0 %531, %v269
        %v533 = vpop.permute.xlu0 %532
        %536 = vset.pattern.permute.xlu0 0
        %537 = vperm.xlu0 %536, %v270
        %v538 = vpop.permute.xlu0 %537
        %541 = vset.pattern.permute.xlu0 0
        %542 = vperm.xlu0 %541, %v271
        %v543 = vpop.permute.xlu0 %542
        %546 = vset.pattern.permute.xlu0 0
        %547 = vperm.xlu0 %546, %v272
        %v548 = vpop.permute.xlu0 %547
        %551 = vset.pattern.permute.xlu0 0
        %552 = vperm.xlu0 %551, %v273
        %v553 = vpop.permute.xlu0 %552
        %v555 = vmul.f32 %v398, 0.0
        %v556 = vmul.f32 %v403, 0.0
        %v557 = vmul.f32 %v394, %v408
        %v558 = vmul.f32 %v307, %v413
        %v559 = vmul.f32 %v309, %v418
        %v560 = vmul.f32 %v311, %v423
        %v561 = vmul.f32 %v313, %v428
        %v562 = vmul.f32 %v315, %v433
        %v563 = vmul.f32 %v317, %v438
        %v564 = vmul.f32 %v319, %v443
        %v565 = vmul.f32 %v321, %v448
        %v566 = vmul.f32 %v323, %v453
        %v567 = vmul.f32 %v325, %v458
        %v568 = vmul.f32 %v327, %v463
        %v569 = vmul.f32 %v329, %v468
        %v570 = vmul.f32 %v331, %v473
        %v571 = vmul.f32 %v333, %v478
        %v572 = vmul.f32 %v335, %v483
        %v573 = vmul.f32 %v337, %v488
        %v574 = vmul.f32 %v339, %v493
        %v575 = vmul.f32 %v341, %v498
        %v576 = vmul.f32 %v343, %v503
        %v577 = vmul.f32 %v345, %v508
        %v578 = vmul.f32 %v347, %v513
        %v579 = vmul.f32 %v349, %v518
        %v580 = vmul.f32 %v351, %v523
        %v581 = vmul.f32 %v353, %v528
        %v582 = vmul.f32 %v355, %v533
        %v583 = vmul.f32 %v357, %v538
        %v584 = vmul.f32 %v359, %v543
        %v585 = vmul.f32 %v361, %v548
        %v586 = vmul.f32 %v363, %v553
        %vm588 = vcmask 1046528
        %v589 = vrot.slane %v210, 1
        %v590 = vrot.slane %v211, 1
        %v591 = vsel %vm588, %v589, %v590
        %v592 = vrot.slane %v212, 1
        %v593 = vsel %vm588, %v590, %v592
        %v594 = vrot.slane %v213, 1
        %v595 = vsel %vm588, %v592, %v594
        %v596 = vrot.slane %v214, 1
        %v597 = vsel %vm588, %v594, %v596
        %v598 = vrot.slane %v215, 1
        %v599 = vsel %vm588, %v596, %v598
        %v600 = vrot.slane %v216, 1
        %v601 = vsel %vm588, %v598, %v600
        %v602 = vrot.slane %v217, 1
        %v603 = vsel %vm588, %v600, %v602
        %v604 = vrot.slane %v218, 1
        %v605 = vsel %vm588, %v602, %v604
        %v606 = vrot.slane %v219, 1
        %v607 = vsel %vm588, %v604, %v606
        %v608 = vrot.slane %v220, 1
        %v609 = vsel %vm588, %v606, %v608
        %v610 = vrot.slane %v221, 1
        %v611 = vsel %vm588, %v608, %v610
        %v612 = vrot.slane %v222, 1
        %v613 = vsel %vm588, %v610, %v612
        %v614 = vrot.slane %v223, 1
        %v615 = vsel %vm588, %v612, %v614
        %v616 = vrot.slane %v224, 1
        %v617 = vsel %vm588, %v614, %v616
        %v618 = vrot.slane %v225, 1
        %v619 = vsel %vm588, %v616, %v618
        %v620 = vrot.slane %v226, 1
        %v621 = vsel %vm588, %v618, %v620
        %v622 = vrot.slane %v227, 1
        %v623 = vsel %vm588, %v620, %v622
        %v624 = vrot.slane %v228, 1
        %v625 = vsel %vm588, %v622, %v624
        %v626 = vrot.slane %v229, 1
        %v627 = vsel %vm588, %v624, %v626
        %v628 = vrot.slane %v230, 1
        %v629 = vsel %vm588, %v626, %v628
        %v630 = vrot.slane %v231, 1
        %v631 = vsel %vm588, %v628, %v630
        %v632 = vrot.slane %v232, 1
        %v633 = vsel %vm588, %v630, %v632
        %v634 = vrot.slane %v233, 1
        %v635 = vsel %vm588, %v632, %v634
        %v636 = vrot.slane %v234, 1
        %v637 = vsel %vm588, %v634, %v636
        %v638 = vrot.slane %v235, 1
        %v639 = vsel %vm588, %v636, %v638
        %v640 = vrot.slane %v236, 1
        %v641 = vsel %vm588, %v638, %v640
        %v642 = vrot.slane %v237, 1
        %v643 = vsel %vm588, %v640, %v642
        %v644 = vrot.slane %v238, 1
        %v645 = vsel %vm588, %v642, %v644
        %v646 = vrot.slane %v239, 1
        %v647 = vsel %vm588, %v644, %v646
        %v648 = vrot.slane %v240, 1
        %v649 = vsel %vm588, %v646, %v648
        %v681 = vsel %vm588, 0.0, %v589
        %682 = vset.pattern.permute.xlu0 1
        %683 = vperm.xlu0 %682, %v242
        %v684 = vpop.permute.xlu0 %683
        %686 = vset.pattern.permute.xlu0 1
        %687 = vperm.xlu0 %686, %v243
        %v688 = vpop.permute.xlu0 %687
        %690 = vset.pattern.permute.xlu0 1
        %691 = vperm.xlu0 %690, %v244
        %v692 = vpop.permute.xlu0 %691
        %694 = vset.pattern.permute.xlu0 1
        %695 = vperm.xlu0 %694, %v245
        %v696 = vpop.permute.xlu0 %695
        %698 = vset.pattern.permute.xlu0 1
        %699 = vperm.xlu0 %698, %v246
        %v700 = vpop.permute.xlu0 %699
        %702 = vset.pattern.permute.xlu0 1
        %703 = vperm.xlu0 %702, %v247
        %v704 = vpop.permute.xlu0 %703
        %706 = vset.pattern.permute.xlu0 1
        %707 = vperm.xlu0 %706, %v248
        %v708 = vpop.permute.xlu0 %707
        %710 = vset.pattern.permute.xlu0 1
        %711 = vperm.xlu0 %710, %v249
        %v712 = vpop.permute.xlu0 %711
        %714 = vset.pattern.permute.xlu0 1
        %715 = vperm.xlu0 %714, %v250
        %v716 = vpop.permute.xlu0 %715
        %718 = vset.pattern.permute.xlu0 1
        %719 = vperm.xlu0 %718, %v251
        %v720 = vpop.permute.xlu0 %719
        %722 = vset.pattern.permute.xlu0 1
        %723 = vperm.xlu0 %722, %v252
        %v724 = vpop.permute.xlu0 %723
        %726 = vset.pattern.permute.xlu0 1
        %727 = vperm.xlu0 %726, %v253
        %v728 = vpop.permute.xlu0 %727
        %730 = vset.pattern.permute.xlu0 1
        %731 = vperm.xlu0 %730, %v254
        %v732 = vpop.permute.xlu0 %731
        %734 = vset.pattern.permute.xlu0 1
        %735 = vperm.xlu0 %734, %v255
        %v736 = vpop.permute.xlu0 %735
        %738 = vset.pattern.permute.xlu0 1
        %739 = vperm.xlu0 %738, %v256
        %v740 = vpop.permute.xlu0 %739
        %742 = vset.pattern.permute.xlu0 1
        %743 = vperm.xlu0 %742, %v257
        %v744 = vpop.permute.xlu0 %743
        %746 = vset.pattern.permute.xlu0 1
        %747 = vperm.xlu0 %746, %v258
        %v748 = vpop.permute.xlu0 %747
        %750 = vset.pattern.permute.xlu0 1
        %751 = vperm.xlu0 %750, %v259
        %v752 = vpop.permute.xlu0 %751
        %754 = vset.pattern.permute.xlu0 1
        %755 = vperm.xlu0 %754, %v260
        %v756 = vpop.permute.xlu0 %755
        %758 = vset.pattern.permute.xlu0 1
        %759 = vperm.xlu0 %758, %v261
        %v760 = vpop.permute.xlu0 %759
        %762 = vset.pattern.permute.xlu0 1
        %763 = vperm.xlu0 %762, %v262
        %v764 = vpop.permute.xlu0 %763
        %766 = vset.pattern.permute.xlu0 1
        %767 = vperm.xlu0 %766, %v263
        %v768 = vpop.permute.xlu0 %767
        %770 = vset.pattern.permute.xlu0 1
        %771 = vperm.xlu0 %770, %v264
        %v772 = vpop.permute.xlu0 %771
        %774 = vset.pattern.permute.xlu0 1
        %775 = vperm.xlu0 %774, %v265
        %v776 = vpop.permute.xlu0 %775
        %778 = vset.pattern.permute.xlu0 1
        %779 = vperm.xlu0 %778, %v266
        %v780 = vpop.permute.xlu0 %779
        %782 = vset.pattern.permute.xlu0 1
        %783 = vperm.xlu0 %782, %v267
        %v784 = vpop.permute.xlu0 %783
        %786 = vset.pattern.permute.xlu0 1
        %787 = vperm.xlu0 %786, %v268
        %v788 = vpop.permute.xlu0 %787
        %790 = vset.pattern.permute.xlu0 1
        %791 = vperm.xlu0 %790, %v269
        %v792 = vpop.permute.xlu0 %791
        %794 = vset.pattern.permute.xlu0 1
        %795 = vperm.xlu0 %794, %v270
        %v796 = vpop.permute.xlu0 %795
        %798 = vset.pattern.permute.xlu0 1
        %799 = vperm.xlu0 %798, %v271
        %v800 = vpop.permute.xlu0 %799
        %802 = vset.pattern.permute.xlu0 1
        %803 = vperm.xlu0 %802, %v272
        %v804 = vpop.permute.xlu0 %803
        %806 = vset.pattern.permute.xlu0 1
        %807 = vperm.xlu0 %806, %v273
        %v808 = vpop.permute.xlu0 %807
        %v810 = vmul.f32 %v684, 0.0
        %v811 = vmul.f32 %v681, %v688
        %v812 = vmul.f32 %v591, %v692
        %v813 = vmul.f32 %v593, %v696
        %v814 = vmul.f32 %v595, %v700
        %v815 = vmul.f32 %v597, %v704
        %v816 = vmul.f32 %v599, %v708
        %v817 = vmul.f32 %v601, %v712
        %v818 = vmul.f32 %v603, %v716
        %v819 = vmul.f32 %v605, %v720
        %v820 = vmul.f32 %v607, %v724
        %v821 = vmul.f32 %v609, %v728
        %v822 = vmul.f32 %v611, %v732
        %v823 = vmul.f32 %v613, %v736
        %v824 = vmul.f32 %v615, %v740
        %v825 = vmul.f32 %v617, %v744
        %v826 = vmul.f32 %v619, %v748
        %v827 = vmul.f32 %v621, %v752
        %v828 = vmul.f32 %v623, %v756
        %v829 = vmul.f32 %v625, %v760
        %v830 = vmul.f32 %v627, %v764
        %v831 = vmul.f32 %v629, %v768
        %v832 = vmul.f32 %v631, %v772
        %v833 = vmul.f32 %v633, %v776
        %v834 = vmul.f32 %v635, %v780
        %v835 = vmul.f32 %v637, %v784
        %v836 = vmul.f32 %v639, %v788
        %v837 = vmul.f32 %v641, %v792
        %v838 = vmul.f32 %v643, %v796
        %v839 = vmul.f32 %v645, %v800
        %v840 = vmul.f32 %v647, %v804
        %v841 = vmul.f32 %v649, %v808
        %v843 = vrot.slane %v240, 7
        %v844 = vsel %vm304, %v362, %v843
        %v845 = vrot.slane %v241, 7
        %v846 = vsel %vm304, %v843, %v845
        %v849 = vmul.f32 %v394, %v398
        %v850 = vmul.f32 %v307, %v403
        %v851 = vmul.f32 %v309, %v408
        %v852 = vmul.f32 %v311, %v413
        %v853 = vmul.f32 %v313, %v418
        %v854 = vmul.f32 %v315, %v423
        %v855 = vmul.f32 %v317, %v428
        %v856 = vmul.f32 %v319, %v433
        %v857 = vmul.f32 %v321, %v438
        %v858 = vmul.f32 %v323, %v443
        %v859 = vmul.f32 %v325, %v448
        %v860 = vmul.f32 %v327, %v453
        %v861 = vmul.f32 %v329, %v458
        %v862 = vmul.f32 %v331, %v463
        %v863 = vmul.f32 %v333, %v468
        %v864 = vmul.f32 %v335, %v473
        %v865 = vmul.f32 %v337, %v478
        %v866 = vmul.f32 %v339, %v483
        %v867 = vmul.f32 %v341, %v488
        %v868 = vmul.f32 %v343, %v493
        %v869 = vmul.f32 %v345, %v498
        %v870 = vmul.f32 %v347, %v503
        %v871 = vmul.f32 %v349, %v508
        %v872 = vmul.f32 %v351, %v513
        %v873 = vmul.f32 %v353, %v518
        %v874 = vmul.f32 %v355, %v523
        %v875 = vmul.f32 %v357, %v528
        %v876 = vmul.f32 %v359, %v533
        %v877 = vmul.f32 %v361, %v538
        %v878 = vmul.f32 %v363, %v543
        %v879 = vmul.f32 %v844, %v548
        %v880 = vmul.f32 %v846, %v553
        %v881 = vrot.slane %v241, 1
        %v882 = vsel %vm588, %v648, %v881
        %v885 = vsel %vm588, %v881, 0.0
        %v886 = vmul.f32 %v591, %v684
        %v887 = vmul.f32 %v593, %v688
        %v888 = vmul.f32 %v595, %v692
        %v889 = vmul.f32 %v597, %v696
        %v890 = vmul.f32 %v599, %v700
        %v891 = vmul.f32 %v601, %v704
        %v892 = vmul.f32 %v603, %v708
        %v893 = vmul.f32 %v605, %v712
        %v894 = vmul.f32 %v607, %v716
        %v895 = vmul.f32 %v609, %v720
        %v896 = vmul.f32 %v611, %v724
        %v897 = vmul.f32 %v613, %v728
        %v898 = vmul.f32 %v615, %v732
        %v899 = vmul.f32 %v617, %v736
        %v900 = vmul.f32 %v619, %v740
        %v901 = vmul.f32 %v621, %v744
        %v902 = vmul.f32 %v623, %v748
        %v903 = vmul.f32 %v625, %v752
        %v904 = vmul.f32 %v627, %v756
        %v905 = vmul.f32 %v629, %v760
        %v906 = vmul.f32 %v631, %v764
        %v907 = vmul.f32 %v633, %v768
        %v908 = vmul.f32 %v635, %v772
        %v909 = vmul.f32 %v637, %v776
        %v910 = vmul.f32 %v639, %v780
        %v911 = vmul.f32 %v641, %v784
        %v912 = vmul.f32 %v643, %v788
        %v913 = vmul.f32 %v645, %v792
        %v914 = vmul.f32 %v647, %v796
        %v915 = vmul.f32 %v649, %v800
        %v916 = vmul.f32 %v882, %v804
        %v917 = vmul.f32 %v885, %v808
        %v919 = vsel %vm304, %v845, 0.0
        %v920 = vmul.f32 %v309, %v398
        %v921 = vmul.f32 %v311, %v403
        %v922 = vmul.f32 %v313, %v408
        %v923 = vmul.f32 %v315, %v413
        %v924 = vmul.f32 %v317, %v418
        %v925 = vmul.f32 %v319, %v423
        %v926 = vmul.f32 %v321, %v428
        %v927 = vmul.f32 %v323, %v433
        %v928 = vmul.f32 %v325, %v438
        %v929 = vmul.f32 %v327, %v443
        %v930 = vmul.f32 %v329, %v448
        %v931 = vmul.f32 %v331, %v453
        %v932 = vmul.f32 %v333, %v458
        %v933 = vmul.f32 %v335, %v463
        %v934 = vmul.f32 %v337, %v468
        %v935 = vmul.f32 %v339, %v473
        %v936 = vmul.f32 %v341, %v478
        %v937 = vmul.f32 %v343, %v483
        %v938 = vmul.f32 %v345, %v488
        %v939 = vmul.f32 %v347, %v493
        %v940 = vmul.f32 %v349, %v498
        %v941 = vmul.f32 %v351, %v503
        %v942 = vmul.f32 %v353, %v508
        %v943 = vmul.f32 %v355, %v513
        %v944 = vmul.f32 %v357, %v518
        %v945 = vmul.f32 %v359, %v523
        %v946 = vmul.f32 %v361, %v528
        %v947 = vmul.f32 %v363, %v533
        %v948 = vmul.f32 %v844, %v538
        %v949 = vmul.f32 %v846, %v543
        %v950 = vmul.f32 %v919, %v548
        %v951 = vmul.f32 %v553, 0.0
        %v952 = vmul.f32 %v595, %v684
        %v953 = vmul.f32 %v597, %v688
        %v954 = vmul.f32 %v599, %v692
        %v955 = vmul.f32 %v601, %v696
        %v956 = vmul.f32 %v603, %v700
        %v957 = vmul.f32 %v605, %v704
        %v958 = vmul.f32 %v607, %v708
        %v959 = vmul.f32 %v609, %v712
        %v960 = vmul.f32 %v611, %v716
        %v961 = vmul.f32 %v613, %v720
        %v962 = vmul.f32 %v615, %v724
        %v963 = vmul.f32 %v617, %v728
        %v964 = vmul.f32 %v619, %v732
        %v965 = vmul.f32 %v621, %v736
        %v966 = vmul.f32 %v623, %v740
        %v967 = vmul.f32 %v625, %v744
        %v968 = vmul.f32 %v627, %v748
        %v969 = vmul.f32 %v629, %v752
        %v970 = vmul.f32 %v631, %v756
        %v971 = vmul.f32 %v633, %v760
        %v972 = vmul.f32 %v635, %v764
        %v973 = vmul.f32 %v637, %v768
        %v974 = vmul.f32 %v639, %v772
        %v975 = vmul.f32 %v641, %v776
        %v976 = vmul.f32 %v643, %v780
        %v977 = vmul.f32 %v645, %v784
        %v978 = vmul.f32 %v647, %v788
        %v979 = vmul.f32 %v649, %v792
        %v980 = vmul.f32 %v882, %v796
        %v981 = vmul.f32 %v885, %v800
        %v982 = vmul.f32 %v804, 0.0
        %v983 = vmul.f32 %v808, 0.0
        %985 = vrot.lane.b32.xlu0 0.0, 4
        %v986 = vpop.permute.xlu0 %985
        %987 = vrot.lane.b32.xlu0 %v210, 4
        %v988 = vpop.permute.xlu0 %987
        %989 = vrot.lane.b32.xlu0 %v211, 4
        %v990 = vpop.permute.xlu0 %989
        %991 = vrot.lane.b32.xlu0 %v212, 4
        %v992 = vpop.permute.xlu0 %991
        %993 = vrot.lane.b32.xlu0 %v213, 4
        %v994 = vpop.permute.xlu0 %993
        %995 = vrot.lane.b32.xlu0 %v214, 4
        %v996 = vpop.permute.xlu0 %995
        %997 = vrot.lane.b32.xlu0 %v215, 4
        %v998 = vpop.permute.xlu0 %997
        %999 = vrot.lane.b32.xlu0 %v216, 4
        %v1000 = vpop.permute.xlu0 %999
        %1001 = vrot.lane.b32.xlu0 %v217, 4
        %v1002 = vpop.permute.xlu0 %1001
        %1003 = vrot.lane.b32.xlu0 %v218, 4
        %v1004 = vpop.permute.xlu0 %1003
        %1005 = vrot.lane.b32.xlu0 %v219, 4
        %v1006 = vpop.permute.xlu0 %1005
        %1007 = vrot.lane.b32.xlu0 %v220, 4
        %v1008 = vpop.permute.xlu0 %1007
        %1009 = vrot.lane.b32.xlu0 %v221, 4
        %v1010 = vpop.permute.xlu0 %1009
        %1011 = vrot.lane.b32.xlu0 %v222, 4
        %v1012 = vpop.permute.xlu0 %1011
        %1013 = vrot.lane.b32.xlu0 %v223, 4
        %v1014 = vpop.permute.xlu0 %1013
        %1015 = vrot.lane.b32.xlu0 %v224, 4
        %v1016 = vpop.permute.xlu0 %1015
        %1017 = vrot.lane.b32.xlu0 %v225, 4
        %v1018 = vpop.permute.xlu0 %1017
        %1019 = vrot.lane.b32.xlu0 %v226, 4
        %v1020 = vpop.permute.xlu0 %1019
        %1021 = vrot.lane.b32.xlu0 %v227, 4
        %v1022 = vpop.permute.xlu0 %1021
        %1023 = vrot.lane.b32.xlu0 %v228, 4
        %v1024 = vpop.permute.xlu0 %1023
        %1025 = vrot.lane.b32.xlu0 %v229, 4
        %v1026 = vpop.permute.xlu0 %1025
        %1027 = vrot.lane.b32.xlu0 %v230, 4
        %v1028 = vpop.permute.xlu0 %1027
        %1029 = vrot.lane.b32.xlu0 %v231, 4
        %v1030 = vpop.permute.xlu0 %1029
        %1031 = vrot.lane.b32.xlu0 %v232, 4
        %v1032 = vpop.permute.xlu0 %1031
        %1033 = vrot.lane.b32.xlu0 %v233, 4
        %v1034 = vpop.permute.xlu0 %1033
        %1035 = vrot.lane.b32.xlu0 %v234, 4
        %v1036 = vpop.permute.xlu0 %1035
        %1037 = vrot.lane.b32.xlu0 %v235, 4
        %v1038 = vpop.permute.xlu0 %1037
        %1039 = vrot.lane.b32.xlu0 %v236, 4
        %v1040 = vpop.permute.xlu0 %1039
        %1041 = vrot.lane.b32.xlu0 %v237, 4
        %v1042 = vpop.permute.xlu0 %1041
        %1043 = vrot.lane.b32.xlu0 %v238, 4
        %v1044 = vpop.permute.xlu0 %1043
        %1045 = vrot.lane.b32.xlu0 %v239, 4
        %v1046 = vpop.permute.xlu0 %1045
        %1110 = vrot.lane.b32.xlu0 %v810, 8
        %v1111 = vpop.permute.xlu0 %1110
        %1112 = vrot.lane.b32.xlu0 %v811, 8
        %v1113 = vpop.permute.xlu0 %1112
        %1114 = vrot.lane.b32.xlu0 %v812, 8
        %v1115 = vpop.permute.xlu0 %1114
        %1116 = vrot.lane.b32.xlu0 %v813, 8
        %v1117 = vpop.permute.xlu0 %1116
        %1118 = vrot.lane.b32.xlu0 %v814, 8
        %v1119 = vpop.permute.xlu0 %1118
        %1120 = vrot.lane.b32.xlu0 %v815, 8
        %v1121 = vpop.permute.xlu0 %1120
        %1122 = vrot.lane.b32.xlu0 %v816, 8
        %v1123 = vpop.permute.xlu0 %1122
        %1124 = vrot.lane.b32.xlu0 %v817, 8
        %v1125 = vpop.permute.xlu0 %1124
        %1126 = vrot.lane.b32.xlu0 %v818, 8
        %v1127 = vpop.permute.xlu0 %1126
        %1128 = vrot.lane.b32.xlu0 %v819, 8
        %v1129 = vpop.permute.xlu0 %1128
        %1130 = vrot.lane.b32.xlu0 %v820, 8
        %v1131 = vpop.permute.xlu0 %1130
        %1132 = vrot.lane.b32.xlu0 %v821, 8
        %v1133 = vpop.permute.xlu0 %1132
        %1134 = vrot.lane.b32.xlu0 %v822, 8
        %v1135 = vpop.permute.xlu0 %1134
        %1136 = vrot.lane.b32.xlu0 %v823, 8
        %v1137 = vpop.permute.xlu0 %1136
        %1138 = vrot.lane.b32.xlu0 %v824, 8
        %v1139 = vpop.permute.xlu0 %1138
        %1140 = vrot.lane.b32.xlu0 %v825, 8
        %v1141 = vpop.permute.xlu0 %1140
        %1142 = vrot.lane.b32.xlu0 %v826, 8
        %v1143 = vpop.permute.xlu0 %1142
        %1144 = vrot.lane.b32.xlu0 %v827, 8
        %v1145 = vpop.permute.xlu0 %1144
        %1146 = vrot.lane.b32.xlu0 %v828, 8
        %v1147 = vpop.permute.xlu0 %1146
        %1148 = vrot.lane.b32.xlu0 %v829, 8
        %v1149 = vpop.permute.xlu0 %1148
        %1150 = vrot.lane.b32.xlu0 %v830, 8
        %v1151 = vpop.permute.xlu0 %1150
        %1152 = vrot.lane.b32.xlu0 %v831, 8
        %v1153 = vpop.permute.xlu0 %1152
        %1154 = vrot.lane.b32.xlu0 %v832, 8
        %v1155 = vpop.permute.xlu0 %1154
        %1156 = vrot.lane.b32.xlu0 %v833, 8
        %v1157 = vpop.permute.xlu0 %1156
        %1158 = vrot.lane.b32.xlu0 %v834, 8
        %v1159 = vpop.permute.xlu0 %1158
        %1160 = vrot.lane.b32.xlu0 %v835, 8
        %v1161 = vpop.permute.xlu0 %1160
        %1162 = vrot.lane.b32.xlu0 %v836, 8
        %v1163 = vpop.permute.xlu0 %1162
        %1164 = vrot.lane.b32.xlu0 %v837, 8
        %v1165 = vpop.permute.xlu0 %1164
        %1166 = vrot.lane.b32.xlu0 %v838, 8
        %v1167 = vpop.permute.xlu0 %1166
        %1168 = vrot.lane.b32.xlu0 %v839, 8
        %v1169 = vpop.permute.xlu0 %1168
        %1170 = vrot.lane.b32.xlu0 %v840, 8
        %v1171 = vpop.permute.xlu0 %1170
        %1172 = vrot.lane.b32.xlu0 %v841, 8
        %v1173 = vpop.permute.xlu0 %1172
        %1238 = vrot.lane.b32.xlu0 %v849, 12
        %v1239 = vpop.permute.xlu0 %1238
        %1240 = vrot.lane.b32.xlu0 %v850, 12
        %v1241 = vpop.permute.xlu0 %1240
        %1242 = vrot.lane.b32.xlu0 %v851, 12
        %v1243 = vpop.permute.xlu0 %1242
        %1244 = vrot.lane.b32.xlu0 %v852, 12
        %v1245 = vpop.permute.xlu0 %1244
        %1246 = vrot.lane.b32.xlu0 %v853, 12
        %v1247 = vpop.permute.xlu0 %1246
        %1248 = vrot.lane.b32.xlu0 %v854, 12
        %v1249 = vpop.permute.xlu0 %1248
        %1250 = vrot.lane.b32.xlu0 %v855, 12
        %v1251 = vpop.permute.xlu0 %1250
        %1252 = vrot.lane.b32.xlu0 %v856, 12
        %v1253 = vpop.permute.xlu0 %1252
        %1254 = vrot.lane.b32.xlu0 %v857, 12
        %v1255 = vpop.permute.xlu0 %1254
        %1256 = vrot.lane.b32.xlu0 %v858, 12
        %v1257 = vpop.permute.xlu0 %1256
        %1258 = vrot.lane.b32.xlu0 %v859, 12
        %v1259 = vpop.permute.xlu0 %1258
        %1260 = vrot.lane.b32.xlu0 %v860, 12
        %v1261 = vpop.permute.xlu0 %1260
        %1262 = vrot.lane.b32.xlu0 %v861, 12
        %v1263 = vpop.permute.xlu0 %1262
        %1264 = vrot.lane.b32.xlu0 %v862, 12
        %v1265 = vpop.permute.xlu0 %1264
        %1266 = vrot.lane.b32.xlu0 %v863, 12
        %v1267 = vpop.permute.xlu0 %1266
        %1268 = vrot.lane.b32.xlu0 %v864, 12
        %v1269 = vpop.permute.xlu0 %1268
        %1270 = vrot.lane.b32.xlu0 %v865, 12
        %v1271 = vpop.permute.xlu0 %1270
        %1272 = vrot.lane.b32.xlu0 %v866, 12
        %v1273 = vpop.permute.xlu0 %1272
        %1274 = vrot.lane.b32.xlu0 %v867, 12
        %v1275 = vpop.permute.xlu0 %1274
        %1276 = vrot.lane.b32.xlu0 %v868, 12
        %v1277 = vpop.permute.xlu0 %1276
        %1278 = vrot.lane.b32.xlu0 %v869, 12
        %v1279 = vpop.permute.xlu0 %1278
        %1280 = vrot.lane.b32.xlu0 %v870, 12
        %v1281 = vpop.permute.xlu0 %1280
        %1282 = vrot.lane.b32.xlu0 %v871, 12
        %v1283 = vpop.permute.xlu0 %1282
        %1284 = vrot.lane.b32.xlu0 %v872, 12
        %v1285 = vpop.permute.xlu0 %1284
        %1286 = vrot.lane.b32.xlu0 %v873, 12
        %v1287 = vpop.permute.xlu0 %1286
        %1288 = vrot.lane.b32.xlu0 %v874, 12
        %v1289 = vpop.permute.xlu0 %1288
        %1290 = vrot.lane.b32.xlu0 %v875, 12
        %v1291 = vpop.permute.xlu0 %1290
        %1292 = vrot.lane.b32.xlu0 %v876, 12
        %v1293 = vpop.permute.xlu0 %1292
        %1294 = vrot.lane.b32.xlu0 %v877, 12
        %v1295 = vpop.permute.xlu0 %1294
        %1296 = vrot.lane.b32.xlu0 %v878, 12
        %v1297 = vpop.permute.xlu0 %1296
        %1298 = vrot.lane.b32.xlu0 %v879, 12
        %v1299 = vpop.permute.xlu0 %1298
        %1300 = vrot.lane.b32.xlu0 %v880, 12
        %v1301 = vpop.permute.xlu0 %1300
        %1334 = vrot.lane.b32.xlu0 %v210, 16
        %v1335 = vpop.permute.xlu0 %1334
        %1336 = vrot.lane.b32.xlu0 %v211, 16
        %v1337 = vpop.permute.xlu0 %1336
        %1338 = vrot.lane.b32.xlu0 %v212, 16
        %v1339 = vpop.permute.xlu0 %1338
        %1340 = vrot.lane.b32.xlu0 %v213, 16
        %v1341 = vpop.permute.xlu0 %1340
        %1342 = vrot.lane.b32.xlu0 %v214, 16
        %v1343 = vpop.permute.xlu0 %1342
        %1344 = vrot.lane.b32.xlu0 %v215, 16
        %v1345 = vpop.permute.xlu0 %1344
        %1346 = vrot.lane.b32.xlu0 %v216, 16
        %v1347 = vpop.permute.xlu0 %1346
        %1348 = vrot.lane.b32.xlu0 %v217, 16
        %v1349 = vpop.permute.xlu0 %1348
        %1350 = vrot.lane.b32.xlu0 %v218, 16
        %v1351 = vpop.permute.xlu0 %1350
        %1352 = vrot.lane.b32.xlu0 %v219, 16
        %v1353 = vpop.permute.xlu0 %1352
        %1354 = vrot.lane.b32.xlu0 %v220, 16
        %v1355 = vpop.permute.xlu0 %1354
        %1356 = vrot.lane.b32.xlu0 %v221, 16
        %v1357 = vpop.permute.xlu0 %1356
        %1358 = vrot.lane.b32.xlu0 %v222, 16
        %v1359 = vpop.permute.xlu0 %1358
        %1360 = vrot.lane.b32.xlu0 %v223, 16
        %v1361 = vpop.permute.xlu0 %1360
        %1362 = vrot.lane.b32.xlu0 %v224, 16
        %v1363 = vpop.permute.xlu0 %1362
        %1364 = vrot.lane.b32.xlu0 %v225, 16
        %v1365 = vpop.permute.xlu0 %1364
        %1366 = vrot.lane.b32.xlu0 %v226, 16
        %v1367 = vpop.permute.xlu0 %1366
        %1368 = vrot.lane.b32.xlu0 %v227, 16
        %v1369 = vpop.permute.xlu0 %1368
        %1370 = vrot.lane.b32.xlu0 %v228, 16
        %v1371 = vpop.permute.xlu0 %1370
        %1372 = vrot.lane.b32.xlu0 %v229, 16
        %v1373 = vpop.permute.xlu0 %1372
        %1374 = vrot.lane.b32.xlu0 %v230, 16
        %v1375 = vpop.permute.xlu0 %1374
        %1376 = vrot.lane.b32.xlu0 %v231, 16
        %v1377 = vpop.permute.xlu0 %1376
        %1378 = vrot.lane.b32.xlu0 %v232, 16
        %v1379 = vpop.permute.xlu0 %1378
        %1380 = vrot.lane.b32.xlu0 %v233, 16
        %v1381 = vpop.permute.xlu0 %1380
        %1382 = vrot.lane.b32.xlu0 %v234, 16
        %v1383 = vpop.permute.xlu0 %1382
        %1384 = vrot.lane.b32.xlu0 %v235, 16
        %v1385 = vpop.permute.xlu0 %1384
        %1386 = vrot.lane.b32.xlu0 %v236, 16
        %v1387 = vpop.permute.xlu0 %1386
        %1388 = vrot.lane.b32.xlu0 %v237, 16
        %v1389 = vpop.permute.xlu0 %1388
        %1390 = vrot.lane.b32.xlu0 %v238, 16
        %v1391 = vpop.permute.xlu0 %1390
        %1392 = vrot.lane.b32.xlu0 %v239, 16
        %v1393 = vpop.permute.xlu0 %1392
        %1394 = vrot.lane.b32.xlu0 %v240, 16
        %v1395 = vpop.permute.xlu0 %1394
        %1396 = vrot.lane.b32.xlu0 %v241, 16
        %v1397 = vpop.permute.xlu0 %1396
        %1462 = vrot.lane.b32.xlu0 %v886, 20
        %v1463 = vpop.permute.xlu0 %1462
        %1464 = vrot.lane.b32.xlu0 %v887, 20
        %v1465 = vpop.permute.xlu0 %1464
        %1466 = vrot.lane.b32.xlu0 %v888, 20
        %v1467 = vpop.permute.xlu0 %1466
        %1468 = vrot.lane.b32.xlu0 %v889, 20
        %v1469 = vpop.permute.xlu0 %1468
        %1470 = vrot.lane.b32.xlu0 %v890, 20
        %v1471 = vpop.permute.xlu0 %1470
        %1472 = vrot.lane.b32.xlu0 %v891, 20
        %v1473 = vpop.permute.xlu0 %1472
        %1474 = vrot.lane.b32.xlu0 %v892, 20
        %v1475 = vpop.permute.xlu0 %1474
        %1476 = vrot.lane.b32.xlu0 %v893, 20
        %v1477 = vpop.permute.xlu0 %1476
        %1478 = vrot.lane.b32.xlu0 %v894, 20
        %v1479 = vpop.permute.xlu0 %1478
        %1480 = vrot.lane.b32.xlu0 %v895, 20
        %v1481 = vpop.permute.xlu0 %1480
        %1482 = vrot.lane.b32.xlu0 %v896, 20
        %v1483 = vpop.permute.xlu0 %1482
        %1484 = vrot.lane.b32.xlu0 %v897, 20
        %v1485 = vpop.permute.xlu0 %1484
        %1486 = vrot.lane.b32.xlu0 %v898, 20
        %v1487 = vpop.permute.xlu0 %1486
        %1488 = vrot.lane.b32.xlu0 %v899, 20
        %v1489 = vpop.permute.xlu0 %1488
        %1490 = vrot.lane.b32.xlu0 %v900, 20
        %v1491 = vpop.permute.xlu0 %1490
        %1492 = vrot.lane.b32.xlu0 %v901, 20
        %v1493 = vpop.permute.xlu0 %1492
        %1494 = vrot.lane.b32.xlu0 %v902, 20
        %v1495 = vpop.permute.xlu0 %1494
        %1496 = vrot.lane.b32.xlu0 %v903, 20
        %v1497 = vpop.permute.xlu0 %1496
        %1498 = vrot.lane.b32.xlu0 %v904, 20
        %v1499 = vpop.permute.xlu0 %1498
        %1500 = vrot.lane.b32.xlu0 %v905, 20
        %v1501 = vpop.permute.xlu0 %1500
        %1502 = vrot.lane.b32.xlu0 %v906, 20
        %v1503 = vpop.permute.xlu0 %1502
        %1504 = vrot.lane.b32.xlu0 %v907, 20
        %v1505 = vpop.permute.xlu0 %1504
        %1506 = vrot.lane.b32.xlu0 %v908, 20
        %v1507 = vpop.permute.xlu0 %1506
        %1508 = vrot.lane.b32.xlu0 %v909, 20
        %v1509 = vpop.permute.xlu0 %1508
        %1510 = vrot.lane.b32.xlu0 %v910, 20
        %v1511 = vpop.permute.xlu0 %1510
        %1512 = vrot.lane.b32.xlu0 %v911, 20
        %v1513 = vpop.permute.xlu0 %1512
        %1514 = vrot.lane.b32.xlu0 %v912, 20
        %v1515 = vpop.permute.xlu0 %1514
        %1516 = vrot.lane.b32.xlu0 %v913, 20
        %v1517 = vpop.permute.xlu0 %1516
        %1518 = vrot.lane.b32.xlu0 %v914, 20
        %v1519 = vpop.permute.xlu0 %1518
        %1520 = vrot.lane.b32.xlu0 %v915, 20
        %v1521 = vpop.permute.xlu0 %1520
        %1522 = vrot.lane.b32.xlu0 %v916, 20
        %v1523 = vpop.permute.xlu0 %1522
        %1524 = vrot.lane.b32.xlu0 %v917, 20
        %v1525 = vpop.permute.xlu0 %1524
        %1590 = vrot.lane.b32.xlu0 %v920, 24
        %v1591 = vpop.permute.xlu0 %1590
        %1592 = vrot.lane.b32.xlu0 %v921, 24
        %v1593 = vpop.permute.xlu0 %1592
        %1594 = vrot.lane.b32.xlu0 %v922, 24
        %v1595 = vpop.permute.xlu0 %1594
        %1596 = vrot.lane.b32.xlu0 %v923, 24
        %v1597 = vpop.permute.xlu0 %1596
        %1598 = vrot.lane.b32.xlu0 %v924, 24
        %v1599 = vpop.permute.xlu0 %1598
        %1600 = vrot.lane.b32.xlu0 %v925, 24
        %v1601 = vpop.permute.xlu0 %1600
        %1602 = vrot.lane.b32.xlu0 %v926, 24
        %v1603 = vpop.permute.xlu0 %1602
        %1604 = vrot.lane.b32.xlu0 %v927, 24
        %v1605 = vpop.permute.xlu0 %1604
        %1606 = vrot.lane.b32.xlu0 %v928, 24
        %v1607 = vpop.permute.xlu0 %1606
        %1608 = vrot.lane.b32.xlu0 %v929, 24
        %v1609 = vpop.permute.xlu0 %1608
        %1610 = vrot.lane.b32.xlu0 %v930, 24
        %v1611 = vpop.permute.xlu0 %1610
        %1612 = vrot.lane.b32.xlu0 %v931, 24
        %v1613 = vpop.permute.xlu0 %1612
        %1614 = vrot.lane.b32.xlu0 %v932, 24
        %v1615 = vpop.permute.xlu0 %1614
        %1616 = vrot.lane.b32.xlu0 %v933, 24
        %v1617 = vpop.permute.xlu0 %1616
        %1618 = vrot.lane.b32.xlu0 %v934, 24
        %v1619 = vpop.permute.xlu0 %1618
        %1620 = vrot.lane.b32.xlu0 %v935, 24
        %v1621 = vpop.permute.xlu0 %1620
        %1622 = vrot.lane.b32.xlu0 %v936, 24
        %v1623 = vpop.permute.xlu0 %1622
        %1624 = vrot.lane.b32.xlu0 %v937, 24
        %v1625 = vpop.permute.xlu0 %1624
        %1626 = vrot.lane.b32.xlu0 %v938, 24
        %v1627 = vpop.permute.xlu0 %1626
        %1628 = vrot.lane.b32.xlu0 %v939, 24
        %v1629 = vpop.permute.xlu0 %1628
        %1630 = vrot.lane.b32.xlu0 %v940, 24
        %v1631 = vpop.permute.xlu0 %1630
        %1632 = vrot.lane.b32.xlu0 %v941, 24
        %v1633 = vpop.permute.xlu0 %1632
        %1634 = vrot.lane.b32.xlu0 %v942, 24
        %v1635 = vpop.permute.xlu0 %1634
        %1636 = vrot.lane.b32.xlu0 %v943, 24
        %v1637 = vpop.permute.xlu0 %1636
        %1638 = vrot.lane.b32.xlu0 %v944, 24
        %v1639 = vpop.permute.xlu0 %1638
        %1640 = vrot.lane.b32.xlu0 %v945, 24
        %v1641 = vpop.permute.xlu0 %1640
        %1642 = vrot.lane.b32.xlu0 %v946, 24
        %v1643 = vpop.permute.xlu0 %1642
        %1644 = vrot.lane.b32.xlu0 %v947, 24
        %v1645 = vpop.permute.xlu0 %1644
        %1646 = vrot.lane.b32.xlu0 %v948, 24
        %v1647 = vpop.permute.xlu0 %1646
        %1648 = vrot.lane.b32.xlu0 %v949, 24
        %v1649 = vpop.permute.xlu0 %1648
        %1650 = vrot.lane.b32.xlu0 %v950, 24
        %v1651 = vpop.permute.xlu0 %1650
        %1652 = vrot.lane.b32.xlu0 %v951, 24
        %v1653 = vpop.permute.xlu0 %1652
        %1686 = vrot.lane.b32.xlu0 %v212, 28
        %v1687 = vpop.permute.xlu0 %1686
        %1688 = vrot.lane.b32.xlu0 %v213, 28
        %v1689 = vpop.permute.xlu0 %1688
        %1690 = vrot.lane.b32.xlu0 %v214, 28
        %v1691 = vpop.permute.xlu0 %1690
        %1692 = vrot.lane.b32.xlu0 %v215, 28
        %v1693 = vpop.permute.xlu0 %1692
        %1694 = vrot.lane.b32.xlu0 %v216, 28
        %v1695 = vpop.permute.xlu0 %1694
        %1696 = vrot.lane.b32.xlu0 %v217, 28
        %v1697 = vpop.permute.xlu0 %1696
        %1698 = vrot.lane.b32.xlu0 %v218, 28
        %v1699 = vpop.permute.xlu0 %1698
        %1700 = vrot.lane.b32.xlu0 %v219, 28
        %v1701 = vpop.permute.xlu0 %1700
        %1702 = vrot.lane.b32.xlu0 %v220, 28
        %v1703 = vpop.permute.xlu0 %1702
        %1704 = vrot.lane.b32.xlu0 %v221, 28
        %v1705 = vpop.permute.xlu0 %1704
        %1706 = vrot.lane.b32.xlu0 %v222, 28
        %v1707 = vpop.permute.xlu0 %1706
        %1708 = vrot.lane.b32.xlu0 %v223, 28
        %v1709 = vpop.permute.xlu0 %1708
        %1710 = vrot.lane.b32.xlu0 %v224, 28
        %v1711 = vpop.permute.xlu0 %1710
        %1712 = vrot.lane.b32.xlu0 %v225, 28
        %v1713 = vpop.permute.xlu0 %1712
        %1714 = vrot.lane.b32.xlu0 %v226, 28
        %v1715 = vpop.permute.xlu0 %1714
        %1716 = vrot.lane.b32.xlu0 %v227, 28
        %v1717 = vpop.permute.xlu0 %1716
        %1718 = vrot.lane.b32.xlu0 %v228, 28
        %v1719 = vpop.permute.xlu0 %1718
        %1720 = vrot.lane.b32.xlu0 %v229, 28
        %v1721 = vpop.permute.xlu0 %1720
        %1722 = vrot.lane.b32.xlu0 %v230, 28
        %v1723 = vpop.permute.xlu0 %1722
        %1724 = vrot.lane.b32.xlu0 %v231, 28
        %v1725 = vpop.permute.xlu0 %1724
        %1726 = vrot.lane.b32.xlu0 %v232, 28
        %v1727 = vpop.permute.xlu0 %1726
        %1728 = vrot.lane.b32.xlu0 %v233, 28
        %v1729 = vpop.permute.xlu0 %1728
        %1730 = vrot.lane.b32.xlu0 %v234, 28
        %v1731 = vpop.permute.xlu0 %1730
        %1732 = vrot.lane.b32.xlu0 %v235, 28
        %v1733 = vpop.permute.xlu0 %1732
        %1734 = vrot.lane.b32.xlu0 %v236, 28
        %v1735 = vpop.permute.xlu0 %1734
        %1736 = vrot.lane.b32.xlu0 %v237, 28
        %v1737 = vpop.permute.xlu0 %1736
        %1738 = vrot.lane.b32.xlu0 %v238, 28
        %v1739 = vpop.permute.xlu0 %1738
        %1740 = vrot.lane.b32.xlu0 %v239, 28
        %v1741 = vpop.permute.xlu0 %1740
        %1742 = vrot.lane.b32.xlu0 %v240, 28
        %v1743 = vpop.permute.xlu0 %1742
        %1744 = vrot.lane.b32.xlu0 %v241, 28
        %v1745 = vpop.permute.xlu0 %1744
        %1746 = vrot.lane.b32.xlu0 0.0, 28
        %v1747 = vpop.permute.xlu0 %1746
        %1811 = vrot.lane.b32.xlu0 %v952, 32
        %v1812 = vpop.permute.xlu0 %1811
        %1813 = vrot.lane.b32.xlu0 %v953, 32
        %v1814 = vpop.permute.xlu0 %1813
        %1815 = vrot.lane.b32.xlu0 %v954, 32
        %v1816 = vpop.permute.xlu0 %1815
        %1817 = vrot.lane.b32.xlu0 %v955, 32
        %v1818 = vpop.permute.xlu0 %1817
        %1819 = vrot.lane.b32.xlu0 %v956, 32
        %v1820 = vpop.permute.xlu0 %1819
        %1821 = vrot.lane.b32.xlu0 %v957, 32
        %v1822 = vpop.permute.xlu0 %1821
        %1823 = vrot.lane.b32.xlu0 %v958, 32
        %v1824 = vpop.permute.xlu0 %1823
        %1825 = vrot.lane.b32.xlu0 %v959, 32
        %v1826 = vpop.permute.xlu0 %1825
        %1827 = vrot.lane.b32.xlu0 %v960, 32
        %v1828 = vpop.permute.xlu0 %1827
        %1829 = vrot.lane.b32.xlu0 %v961, 32
        %v1830 = vpop.permute.xlu0 %1829
        %1831 = vrot.lane.b32.xlu0 %v962, 32
        %v1832 = vpop.permute.xlu0 %1831
        %1833 = vrot.lane.b32.xlu0 %v963, 32
        %v1834 = vpop.permute.xlu0 %1833
        %1835 = vrot.lane.b32.xlu0 %v964, 32
        %v1836 = vpop.permute.xlu0 %1835
        %1837 = vrot.lane.b32.xlu0 %v965, 32
        %v1838 = vpop.permute.xlu0 %1837
        %1839 = vrot.lane.b32.xlu0 %v966, 32
        %v1840 = vpop.permute.xlu0 %1839
        %1841 = vrot.lane.b32.xlu0 %v967, 32
        %v1842 = vpop.permute.xlu0 %1841
        %1843 = vrot.lane.b32.xlu0 %v968, 32
        %v1844 = vpop.permute.xlu0 %1843
        %1845 = vrot.lane.b32.xlu0 %v969, 32
        %v1846 = vpop.permute.xlu0 %1845
        %1847 = vrot.lane.b32.xlu0 %v970, 32
        %v1848 = vpop.permute.xlu0 %1847
        %1849 = vrot.lane.b32.xlu0 %v971, 32
        %v1850 = vpop.permute.xlu0 %1849
        %1851 = vrot.lane.b32.xlu0 %v972, 32
        %v1852 = vpop.permute.xlu0 %1851
        %1853 = vrot.lane.b32.xlu0 %v973, 32
        %v1854 = vpop.permute.xlu0 %1853
        %1855 = vrot.lane.b32.xlu0 %v974, 32
        %v1856 = vpop.permute.xlu0 %1855
        %1857 = vrot.lane.b32.xlu0 %v975, 32
        %v1858 = vpop.permute.xlu0 %1857
        %1859 = vrot.lane.b32.xlu0 %v976, 32
        %v1860 = vpop.permute.xlu0 %1859
        %1861 = vrot.lane.b32.xlu0 %v977, 32
        %v1862 = vpop.permute.xlu0 %1861
        %1863 = vrot.lane.b32.xlu0 %v978, 32
        %v1864 = vpop.permute.xlu0 %1863
        %1865 = vrot.lane.b32.xlu0 %v979, 32
        %v1866 = vpop.permute.xlu0 %1865
        %1867 = vrot.lane.b32.xlu0 %v980, 32
        %v1868 = vpop.permute.xlu0 %1867
        %1869 = vrot.lane.b32.xlu0 %v981, 32
        %v1870 = vpop.permute.xlu0 %1869
        %1871 = vrot.lane.b32.xlu0 %v982, 32
        %v1872 = vpop.permute.xlu0 %1871
        %1873 = vrot.lane.b32.xlu0 %v983, 32
        %v1874 = vpop.permute.xlu0 %1873
        %vm1907 = vcmask 31744
        %v1908 = vsel %vm1907, %v555, %v986
        %v1909 = vsel %vm1907, %v556, %v986
        %v1910 = vsel %vm1907, %v557, %v988
        %v1911 = vsel %vm1907, %v558, %v990
        %v1912 = vsel %vm1907, %v559, %v992
        %v1913 = vsel %vm1907, %v560, %v994
        %v1914 = vsel %vm1907, %v561, %v996
        %v1915 = vsel %vm1907, %v562, %v998
        %v1916 = vsel %vm1907, %v563, %v1000
        %v1917 = vsel %vm1907, %v564, %v1002
        %v1918 = vsel %vm1907, %v565, %v1004
        %v1919 = vsel %vm1907, %v566, %v1006
        %v1920 = vsel %vm1907, %v567, %v1008
        %v1921 = vsel %vm1907, %v568, %v1010
        %v1922 = vsel %vm1907, %v569, %v1012
        %v1923 = vsel %vm1907, %v570, %v1014
        %v1924 = vsel %vm1907, %v571, %v1016
        %v1925 = vsel %vm1907, %v572, %v1018
        %v1926 = vsel %vm1907, %v573, %v1020
        %v1927 = vsel %vm1907, %v574, %v1022
        %v1928 = vsel %vm1907, %v575, %v1024
        %v1929 = vsel %vm1907, %v576, %v1026
        %v1930 = vsel %vm1907, %v577, %v1028
        %v1931 = vsel %vm1907, %v578, %v1030
        %v1932 = vsel %vm1907, %v579, %v1032
        %v1933 = vsel %vm1907, %v580, %v1034
        %v1934 = vsel %vm1907, %v581, %v1036
        %v1935 = vsel %vm1907, %v582, %v1038
        %v1936 = vsel %vm1907, %v583, %v1040
        %v1937 = vsel %vm1907, %v584, %v1042
        %v1938 = vsel %vm1907, %v585, %v1044
        %v1939 = vsel %vm1907, %v586, %v1046
        %vm1940 = vcmask 64512
        %v1941 = vsel %vm1940, %v1908, %v1111
        %v1942 = vsel %vm1940, %v1909, %v1113
        %v1943 = vsel %vm1940, %v1910, %v1115
        %v1944 = vsel %vm1940, %v1911, %v1117
        %v1945 = vsel %vm1940, %v1912, %v1119
        %v1946 = vsel %vm1940, %v1913, %v1121
        %v1947 = vsel %vm1940, %v1914, %v1123
        %v1948 = vsel %vm1940, %v1915, %v1125
        %v1949 = vsel %vm1940, %v1916, %v1127
        %v1950 = vsel %vm1940, %v1917, %v1129
        %v1951 = vsel %vm1940, %v1918, %v1131
        %v1952 = vsel %vm1940, %v1919, %v1133
        %v1953 = vsel %vm1940, %v1920, %v1135
        %v1954 = vsel %vm1940, %v1921, %v1137
        %v1955 = vsel %vm1940, %v1922, %v1139
        %v1956 = vsel %vm1940, %v1923, %v1141
        %v1957 = vsel %vm1940, %v1924, %v1143
        %v1958 = vsel %vm1940, %v1925, %v1145
        %v1959 = vsel %vm1940, %v1926, %v1147
        %v1960 = vsel %vm1940, %v1927, %v1149
        %v1961 = vsel %vm1940, %v1928, %v1151
        %v1962 = vsel %vm1940, %v1929, %v1153
        %v1963 = vsel %vm1940, %v1930, %v1155
        %v1964 = vsel %vm1940, %v1931, %v1157
        %v1965 = vsel %vm1940, %v1932, %v1159
        %v1966 = vsel %vm1940, %v1933, %v1161
        %v1967 = vsel %vm1940, %v1934, %v1163
        %v1968 = vsel %vm1940, %v1935, %v1165
        %v1969 = vsel %vm1940, %v1936, %v1167
        %v1970 = vsel %vm1940, %v1937, %v1169
        %v1971 = vsel %vm1940, %v1938, %v1171
        %v1972 = vsel %vm1940, %v1939, %v1173
        %vm1973 = vcmask 97280
        %v1974 = vsel %vm1973, %v1941, %v1239
        %v1975 = vsel %vm1973, %v1942, %v1241
        %v1976 = vsel %vm1973, %v1943, %v1243
        %v1977 = vsel %vm1973, %v1944, %v1245
        %v1978 = vsel %vm1973, %v1945, %v1247
        %v1979 = vsel %vm1973, %v1946, %v1249
        %v1980 = vsel %vm1973, %v1947, %v1251
        %v1981 = vsel %vm1973, %v1948, %v1253
        %v1982 = vsel %vm1973, %v1949, %v1255
        %v1983 = vsel %vm1973, %v1950, %v1257
        %v1984 = vsel %vm1973, %v1951, %v1259
        %v1985 = vsel %vm1973, %v1952, %v1261
        %v1986 = vsel %vm1973, %v1953, %v1263
        %v1987 = vsel %vm1973, %v1954, %v1265
        %v1988 = vsel %vm1973, %v1955, %v1267
        %v1989 = vsel %vm1973, %v1956, %v1269
        %v1990 = vsel %vm1973, %v1957, %v1271
        %v1991 = vsel %vm1973, %v1958, %v1273
        %v1992 = vsel %vm1973, %v1959, %v1275
        %v1993 = vsel %vm1973, %v1960, %v1277
        %v1994 = vsel %vm1973, %v1961, %v1279
        %v1995 = vsel %vm1973, %v1962, %v1281
        %v1996 = vsel %vm1973, %v1963, %v1283
        %v1997 = vsel %vm1973, %v1964, %v1285
        %v1998 = vsel %vm1973, %v1965, %v1287
        %v1999 = vsel %vm1973, %v1966, %v1289
        %v2000 = vsel %vm1973, %v1967, %v1291
        %v2001 = vsel %vm1973, %v1968, %v1293
        %v2002 = vsel %vm1973, %v1969, %v1295
        %v2003 = vsel %vm1973, %v1970, %v1297
        %v2004 = vsel %vm1973, %v1971, %v1299
        %v2005 = vsel %vm1973, %v1972, %v1301
        %vm2006 = vcmask 130048
        %v2007 = vsel %vm2006, %v1974, %v1335
        %v2008 = vsel %vm2006, %v1975, %v1337
        %v2009 = vsel %vm2006, %v1976, %v1339
        %v2010 = vsel %vm2006, %v1977, %v1341
        %v2011 = vsel %vm2006, %v1978, %v1343
        %v2012 = vsel %vm2006, %v1979, %v1345
        %v2013 = vsel %vm2006, %v1980, %v1347
        %v2014 = vsel %vm2006, %v1981, %v1349
        %v2015 = vsel %vm2006, %v1982, %v1351
        %v2016 = vsel %vm2006, %v1983, %v1353
        %v2017 = vsel %vm2006, %v1984, %v1355
        %v2018 = vsel %vm2006, %v1985, %v1357
        %v2019 = vsel %vm2006, %v1986, %v1359
        %v2020 = vsel %vm2006, %v1987, %v1361
        %v2021 = vsel %vm2006, %v1988, %v1363
        %v2022 = vsel %vm2006, %v1989, %v1365
        %v2023 = vsel %vm2006, %v1990, %v1367
        %v2024 = vsel %vm2006, %v1991, %v1369
        %v2025 = vsel %vm2006, %v1992, %v1371
        %v2026 = vsel %vm2006, %v1993, %v1373
        %v2027 = vsel %vm2006, %v1994, %v1375
        %v2028 = vsel %vm2006, %v1995, %v1377
        %v2029 = vsel %vm2006, %v1996, %v1379
        %v2030 = vsel %vm2006, %v1997, %v1381
        %v2031 = vsel %vm2006, %v1998, %v1383
        %v2032 = vsel %vm2006, %v1999, %v1385
        %v2033 = vsel %vm2006, %v2000, %v1387
        %v2034 = vsel %vm2006, %v2001, %v1389
        %v2035 = vsel %vm2006, %v2002, %v1391
        %v2036 = vsel %vm2006, %v2003, %v1393
        %v2037 = vsel %vm2006, %v2004, %v1395
        %v2038 = vsel %vm2006, %v2005, %v1397
        %vm2039 = vcmask 162816
        %v2040 = vsel %vm2039, %v2007, %v1463
        %v2041 = vsel %vm2039, %v2008, %v1465
        %v2042 = vsel %vm2039, %v2009, %v1467
        %v2043 = vsel %vm2039, %v2010, %v1469
        %v2044 = vsel %vm2039, %v2011, %v1471
        %v2045 = vsel %vm2039, %v2012, %v1473
        %v2046 = vsel %vm2039, %v2013, %v1475
        %v2047 = vsel %vm2039, %v2014, %v1477
        %v2048 = vsel %vm2039, %v2015, %v1479
        %v2049 = vsel %vm2039, %v2016, %v1481
        %v2050 = vsel %vm2039, %v2017, %v1483
        %v2051 = vsel %vm2039, %v2018, %v1485
        %v2052 = vsel %vm2039, %v2019, %v1487
        %v2053 = vsel %vm2039, %v2020, %v1489
        %v2054 = vsel %vm2039, %v2021, %v1491
        %v2055 = vsel %vm2039, %v2022, %v1493
        %v2056 = vsel %vm2039, %v2023, %v1495
        %v2057 = vsel %vm2039, %v2024, %v1497
        %v2058 = vsel %vm2039, %v2025, %v1499
        %v2059 = vsel %vm2039, %v2026, %v1501
        %v2060 = vsel %vm2039, %v2027, %v1503
        %v2061 = vsel %vm2039, %v2028, %v1505
        %v2062 = vsel %vm2039, %v2029, %v1507
        %v2063 = vsel %vm2039, %v2030, %v1509
        %v2064 = vsel %vm2039, %v2031, %v1511
        %v2065 = vsel %vm2039, %v2032, %v1513
        %v2066 = vsel %vm2039, %v2033, %v1515
        %v2067 = vsel %vm2039, %v2034, %v1517
        %v2068 = vsel %vm2039, %v2035, %v1519
        %v2069 = vsel %vm2039, %v2036, %v1521
        %v2070 = vsel %vm2039, %v2037, %v1523
        %v2071 = vsel %vm2039, %v2038, %v1525
        %vm2072 = vcmask 195584
        %v2073 = vsel %vm2072, %v2040, %v1591
        %v2074 = vsel %vm2072, %v2041, %v1593
        %v2075 = vsel %vm2072, %v2042, %v1595
        %v2076 = vsel %vm2072, %v2043, %v1597
        %v2077 = vsel %vm2072, %v2044, %v1599
        %v2078 = vsel %vm2072, %v2045, %v1601
        %v2079 = vsel %vm2072, %v2046, %v1603
        %v2080 = vsel %vm2072, %v2047, %v1605
        %v2081 = vsel %vm2072, %v2048, %v1607
        %v2082 = vsel %vm2072, %v2049, %v1609
        %v2083 = vsel %vm2072, %v2050, %v1611
        %v2084 = vsel %vm2072, %v2051, %v1613
        %v2085 = vsel %vm2072, %v2052, %v1615
        %v2086 = vsel %vm2072, %v2053, %v1617
        %v2087 = vsel %vm2072, %v2054, %v1619
        %v2088 = vsel %vm2072, %v2055, %v1621
        %v2089 = vsel %vm2072, %v2056, %v1623
        %v2090 = vsel %vm2072, %v2057, %v1625
        %v2091 = vsel %vm2072, %v2058, %v1627
        %v2092 = vsel %vm2072, %v2059, %v1629
        %v2093 = vsel %vm2072, %v2060, %v1631
        %v2094 = vsel %vm2072, %v2061, %v1633
        %v2095 = vsel %vm2072, %v2062, %v1635
        %v2096 = vsel %vm2072, %v2063, %v1637
        %v2097 = vsel %vm2072, %v2064, %v1639
        %v2098 = vsel %vm2072, %v2065, %v1641
        %v2099 = vsel %vm2072, %v2066, %v1643
        %v2100 = vsel %vm2072, %v2067, %v1645
        %v2101 = vsel %vm2072, %v2068, %v1647
        %v2102 = vsel %vm2072, %v2069, %v1649
        %v2103 = vsel %vm2072, %v2070, %v1651
        %v2104 = vsel %vm2072, %v2071, %v1653
        %vm2105 = vcmask 228352
        %v2106 = vsel %vm2105, %v2073, %v1687
        %v2107 = vsel %vm2105, %v2074, %v1689
        %v2108 = vsel %vm2105, %v2075, %v1691
        %v2109 = vsel %vm2105, %v2076, %v1693
        %v2110 = vsel %vm2105, %v2077, %v1695
        %v2111 = vsel %vm2105, %v2078, %v1697
        %v2112 = vsel %vm2105, %v2079, %v1699
        %v2113 = vsel %vm2105, %v2080, %v1701
        %v2114 = vsel %vm2105, %v2081, %v1703
        %v2115 = vsel %vm2105, %v2082, %v1705
        %v2116 = vsel %vm2105, %v2083, %v1707
        %v2117 = vsel %vm2105, %v2084, %v1709
        %v2118 = vsel %vm2105, %v2085, %v1711
        %v2119 = vsel %vm2105, %v2086, %v1713
        %v2120 = vsel %vm2105, %v2087, %v1715
        %v2121 = vsel %vm2105, %v2088, %v1717
        %v2122 = vsel %vm2105, %v2089, %v1719
        %v2123 = vsel %vm2105, %v2090, %v1721
        %v2124 = vsel %vm2105, %v2091, %v1723
        %v2125 = vsel %vm2105, %v2092, %v1725
        %v2126 = vsel %vm2105, %v2093, %v1727
        %v2127 = vsel %vm2105, %v2094, %v1729
        %v2128 = vsel %vm2105, %v2095, %v1731
        %v2129 = vsel %vm2105, %v2096, %v1733
        %v2130 = vsel %vm2105, %v2097, %v1735
        %v2131 = vsel %vm2105, %v2098, %v1737
        %v2132 = vsel %vm2105, %v2099, %v1739
        %v2133 = vsel %vm2105, %v2100, %v1741
        %v2134 = vsel %vm2105, %v2101, %v1743
        %v2135 = vsel %vm2105, %v2102, %v1745
        %v2136 = vsel %vm2105, %v2103, %v1747
        %v2137 = vsel %vm2105, %v2104, %v1747
        %vm2138 = vcmask 261120
        %v2139 = vsel %vm2138, %v2106, %v1812
        %v2140 = vsel %vm2138, %v2107, %v1814
        %v2141 = vsel %vm2138, %v2108, %v1816
        %v2142 = vsel %vm2138, %v2109, %v1818
        %v2143 = vsel %vm2138, %v2110, %v1820
        %v2144 = vsel %vm2138, %v2111, %v1822
        %v2145 = vsel %vm2138, %v2112, %v1824
        %v2146 = vsel %vm2138, %v2113, %v1826
        %v2147 = vsel %vm2138, %v2114, %v1828
        %v2148 = vsel %vm2138, %v2115, %v1830
        %v2149 = vsel %vm2138, %v2116, %v1832
        %v2150 = vsel %vm2138, %v2117, %v1834
        %v2151 = vsel %vm2138, %v2118, %v1836
        %v2152 = vsel %vm2138, %v2119, %v1838
        %v2153 = vsel %vm2138, %v2120, %v1840
        %v2154 = vsel %vm2138, %v2121, %v1842
        %v2155 = vsel %vm2138, %v2122, %v1844
        %v2156 = vsel %vm2138, %v2123, %v1846
        %v2157 = vsel %vm2138, %v2124, %v1848
        %v2158 = vsel %vm2138, %v2125, %v1850
        %v2159 = vsel %vm2138, %v2126, %v1852
        %v2160 = vsel %vm2138, %v2127, %v1854
        %v2161 = vsel %vm2138, %v2128, %v1856
        %v2162 = vsel %vm2138, %v2129, %v1858
        %v2163 = vsel %vm2138, %v2130, %v1860
        %v2164 = vsel %vm2138, %v2131, %v1862
        %v2165 = vsel %vm2138, %v2132, %v1864
        %v2166 = vsel %vm2138, %v2133, %v1866
        %v2167 = vsel %vm2138, %v2134, %v1868
        %v2168 = vsel %vm2138, %v2135, %v1870
        %v2169 = vsel %vm2138, %v2136, %v1872
        %v2170 = vsel %vm2138, %v2137, %v1874
        %v2171 = vpack.c.bf16 %v2140, %v2139
        %v2172 = vpack.c.bf16 %v2142, %v2141
        %v2173 = vpack.c.bf16 %v2144, %v2143
        %v2174 = vpack.c.bf16 %v2146, %v2145
        %v2175 = vpack.c.bf16 %v2148, %v2147
        %v2176 = vpack.c.bf16 %v2150, %v2149
        %v2177 = vpack.c.bf16 %v2152, %v2151
        %v2178 = vpack.c.bf16 %v2154, %v2153
        %v2179 = vpack.c.bf16 %v2156, %v2155
        %v2180 = vpack.c.bf16 %v2158, %v2157
        %v2181 = vpack.c.bf16 %v2160, %v2159
        %v2182 = vpack.c.bf16 %v2162, %v2161
        %v2183 = vpack.c.bf16 %v2164, %v2163
        %v2184 = vpack.c.bf16 %v2166, %v2165
        %v2185 = vpack.c.bf16 %v2168, %v2167
        %v2186 = vpack.c.bf16 %v2170, %v2169
        %v2187 = vld [vmem:[%s1] sm:$0xf]
        %v2188 = vld [vmem:[%s1 + $0x4] sm:$0xf]
        %v2189 = vld [vmem:[%s1 + $0x8] sm:$0xf]
        %v2190 = vld [vmem:[%s1 + $0xc] sm:$0xf]
        %v2191 = vld [vmem:[%s1 + $0x10] sm:$0x3]
        %v2197 = vunpack.c.l.b16 %v2187
        %v2198 = vunpack.c.l.b16 %v2188
        %v2199 = vunpack.c.l.b16 %v2189
        %v2200 = vunpack.c.l.b16 %v2190
        %v2201 = vunpack.c.l.b16 %v2191
        %v2202 = vpack.c.b16 %v2198, %v2197
        %v2203 = vpack.c.b16 %v2200, %v2199
        %v2204 = vpack.c.b16 %v2201, %v2201
        %vm2207 = vcmask 293888
        %v2209 = vsel %vm2207, %v2171, 0
        %v2212 = vsel %vm2207, %v2172, 0
        %v2215 = vsel %vm2207, %v2173, 0
        %v2218 = vsel %vm2207, %v2174, 0
        %v2221 = vsel %vm2207, %v2175, 0
        %v2224 = vsel %vm2207, %v2176, 0
        %v2227 = vsel %vm2207, %v2177, 0
        %v2230 = vsel %vm2207, %v2178, 0
        %v2233 = vsel %vm2207, %v2179, 0
        %v2236 = vsel %vm2207, %v2180, 0
        %v2239 = vsel %vm2207, %v2181, 0
        %v2242 = vsel %vm2207, %v2182, 0
        %v2245 = vsel %vm2207, %v2183, 0
        %v2248 = vsel %vm2207, %v2184, 0
        %v2251 = vsel %vm2207, %v2185, 0
        %v2254 = vsel %vm2207, %v2186, 0
        %vm2256 = vcmask 1041408
        %v2258 = vsel %vm2256, %v2204, 0
        %2260 = vmatprep.subr.bf16.mxu0 0
        %2261 = vmatpush1.bf16.msra.mxu0 %v2202
        %2262 = vmatprep.subr.bf16.mxu0 0
        %2263 = vmatpush1.bf16.msra.mxu0 %v2203
        %2264 = vmatprep.subr.bf16.mxu0 0
        %2265 = vmatpush1.bf16.msra.mxu0 %v2258
        %2266 = vmatprep.subr.bf16.mxu0 0
        %2267 = vmatpush1.bf16.msra.mxu0 0
        %2268 = vmatprep.subr.bf16.mxu0 0
        %2269 = vmatpush1.bf16.msra.mxu0 0
        %2270 = vmatprep.subr.bf16.mxu0 0
        %2271 = vmatpush1.bf16.msra.mxu0 0
        %2272 = vmatprep.subr.bf16.mxu0 0
        %2273 = vmatpush1.bf16.msra.mxu0 0
        %2274 = vmatprep.subr.bf16.mxu0 0
        %2275 = vmatpush1.bf16.msra.mxu0 0
        %2276 = vmatprep.subr.bf16.mxu0 0
        %2277 = vmatpush1.bf16.msra.mxu0 0
        %2278 = vmatprep.subr.bf16.mxu0 0
        %2279 = vmatpush1.bf16.msra.mxu0 0
        %2280 = vmatprep.subr.bf16.mxu0 0
        %2281 = vmatpush1.bf16.msra.mxu0 0
        %2282 = vmatprep.subr.bf16.mxu0 0
        %2283 = vmatpush1.bf16.msra.mxu0 0
        %2284 = vmatprep.subr.bf16.mxu0 0
        %2285 = vmatpush1.bf16.msra.mxu0 0
        %2286 = vmatprep.subr.bf16.mxu0 0
        %2287 = vmatpush1.bf16.msra.mxu0 0
        %2288 = vmatprep.subr.bf16.mxu0 0
        %2289 = vmatpush1.bf16.msra.mxu0 0
        %2290 = vmatprep.subr.bf16.mxu0 0
        %2291 = vmatpush1.bf16.msra.mxu0 0
        %2292 = vmatprep.mubr.bf16.mxu0 0
        %2293 = vmatmul.mubr.bf16.gmra.mrb[0].mxu0 %v2209
        %v2294 = vpop.f32.mrb[0].mxu0
        %v2295 = vadd.f32 0.0, %v2294
        %v2296 = vpop.f32.mrb[0].mxu0
        %v2297 = vpop.f32.mrb[0].mxu0
        %v2298 = vadd.f32 0.0, %v2297
        %v2299 = vpop.f32.mrb[0].mxu0
        %2300 = vmatprep.mubr.bf16.mxu0 0
        %2301 = vmatmul.mubr.bf16.gmra.mrb[0].mxu0 %v2212
        %v2302 = vpop.f32.mrb[0].mxu0
        %v2303 = vadd.f32 0.0, %v2302
        %v2304 = vpop.f32.mrb[0].mxu0
        %v2305 = vpop.f32.mrb[0].mxu0
        %v2306 = vadd.f32 0.0, %v2305
        %v2307 = vpop.f32.mrb[0].mxu0
        %2308 = vmatprep.mubr.bf16.mxu0 0
        %2309 = vmatmul.mubr.bf16.gmra.mrb[0].mxu0 %v2215
        %v2310 = vpop.f32.mrb[0].mxu0
        %v2311 = vadd.f32 0.0, %v2310
        %v2312 = vpop.f32.mrb[0].mxu0
        %v2313 = vpop.f32.mrb[0].mxu0
        %v2314 = vadd.f32 0.0, %v2313
        %v2315 = vpop.f32.mrb[0].mxu0
        %2316 = vmatprep.mubr.bf16.mxu0 0
        %2317 = vmatmul.mubr.bf16.gmra.mrb[0].mxu0 %v2218
        %v2318 = vpop.f32.mrb[0].mxu0
        %v2319 = vadd.f32 0.0, %v2318
        %v2320 = vpop.f32.mrb[0].mxu0
        %v2321 = vpop.f32.mrb[0].mxu0
        %v2322 = vadd.f32 0.0, %v2321
        %v2323 = vpop.f32.mrb[0].mxu0
        %2324 = vmatprep.mubr.bf16.mxu0 0
        %2325 = vmatmul.mubr.bf16.gmra.mrb[0].mxu0 %v2221
        %v2326 = vpop.f32.mrb[0].mxu0
        %v2327 = vadd.f32 0.0, %v2326
        %v2328 = vpop.f32.mrb[0].mxu0
        %v2329 = vpop.f32.mrb[0].mxu0
        %v2330 = vadd.f32 0.0, %v2329
        %v2331 = vpop.f32.mrb[0].mxu0
        %2332 = vmatprep.mubr.bf16.mxu0 0
        %2333 = vmatmul.mubr.bf16.gmra.mrb[0].mxu0 %v2224
        %v2334 = vpop.f32.mrb[0].mxu0
        %v2335 = vadd.f32 0.0, %v2334
        %v2336 = vpop.f32.mrb[0].mxu0
        %v2337 = vpop.f32.mrb[0].mxu0
        %v2338 = vadd.f32 0.0, %v2337
        %v2339 = vpop.f32.mrb[0].mxu0
        %2340 = vmatprep.mubr.bf16.mxu0 0
        %2341 = vmatmul.mubr.bf16.gmra.mrb[0].mxu0 %v2227
        %v2342 = vpop.f32.mrb[0].mxu0
        %v2343 = vadd.f32 0.0, %v2342
        %v2344 = vpop.f32.mrb[0].mxu0
        %v2345 = vpop.f32.mrb[0].mxu0
        %v2346 = vadd.f32 0.0, %v2345
        %v2347 = vpop.f32.mrb[0].mxu0
        %2348 = vmatprep.mubr.bf16.mxu0 0
        %2349 = vmatmul.mubr.bf16.gmra.mrb[0].mxu0 %v2230
        %v2350 = vpop.f32.mrb[0].mxu0
        %v2351 = vadd.f32 0.0, %v2350
        %v2352 = vpop.f32.mrb[0].mxu0
        %v2353 = vpop.f32.mrb[0].mxu0
        %v2354 = vadd.f32 0.0, %v2353
        %v2355 = vpop.f32.mrb[0].mxu0
        %2356 = vmatprep.mubr.bf16.mxu0 0
        %2357 = vmatmul.mubr.bf16.gmra.mrb[0].mxu0 %v2233
        %v2358 = vpop.f32.mrb[0].mxu0
        %v2359 = vadd.f32 0.0, %v2358
        %v2360 = vpop.f32.mrb[0].mxu0
        %v2361 = vpop.f32.mrb[0].mxu0
        %v2362 = vadd.f32 0.0, %v2361
        %v2363 = vpop.f32.mrb[0].mxu0
        %2364 = vmatprep.mubr.bf16.mxu0 0
        %2365 = vmatmul.mubr.bf16.gmra.mrb[0].mxu0 %v2236
        %v2366 = vpop.f32.mrb[0].mxu0
        %v2367 = vadd.f32 0.0, %v2366
        %v2368 = vpop.f32.mrb[0].mxu0
        %v2369 = vpop.f32.mrb[0].mxu0
        %v2370 = vadd.f32 0.0, %v2369
        %v2371 = vpop.f32.mrb[0].mxu0
        %2372 = vmatprep.mubr.bf16.mxu0 0
        %2373 = vmatmul.mubr.bf16.gmra.mrb[0].mxu0 %v2239
        %v2374 = vpop.f32.mrb[0].mxu0
        %v2375 = vadd.f32 0.0, %v2374
        %v2376 = vpop.f32.mrb[0].mxu0
        %v2377 = vpop.f32.mrb[0].mxu0
        %v2378 = vadd.f32 0.0, %v2377
        %v2379 = vpop.f32.mrb[0].mxu0
        %2380 = vmatprep.mubr.bf16.mxu0 0
        %2381 = vmatmul.mubr.bf16.gmra.mrb[0].mxu0 %v2242
        %v2382 = vpop.f32.mrb[0].mxu0
        %v2383 = vadd.f32 0.0, %v2382
        %v2384 = vpop.f32.mrb[0].mxu0
        %v2385 = vpop.f32.mrb[0].mxu0
        %v2386 = vadd.f32 0.0, %v2385
        %v2387 = vpop.f32.mrb[0].mxu0
        %2388 = vmatprep.mubr.bf16.mxu0 0
        %2389 = vmatmul.mubr.bf16.gmra.mrb[0].mxu0 %v2245
        %v2390 = vpop.f32.mrb[0].mxu0
        %v2391 = vadd.f32 0.0, %v2390
        %v2392 = vpop.f32.mrb[0].mxu0
        %v2393 = vpop.f32.mrb[0].mxu0
        %v2394 = vadd.f32 0.0, %v2393
        %v2395 = vpop.f32.mrb[0].mxu0
        %2396 = vmatprep.mubr.bf16.mxu0 0
        %2397 = vmatmul.mubr.bf16.gmra.mrb[0].mxu0 %v2248
        %v2398 = vpop.f32.mrb[0].mxu0
        %v2399 = vadd.f32 0.0, %v2398
        %v2400 = vpop.f32.mrb[0].mxu0
        %v2401 = vpop.f32.mrb[0].mxu0
        %v2402 = vadd.f32 0.0, %v2401
        %v2403 = vpop.f32.mrb[0].mxu0
        %2404 = vmatprep.mubr.bf16.mxu0 0
        %2405 = vmatmul.mubr.bf16.gmra.mrb[0].mxu0 %v2251
        %v2406 = vpop.f32.mrb[0].mxu0
        %v2407 = vadd.f32 0.0, %v2406
        %v2408 = vpop.f32.mrb[0].mxu0
        %v2409 = vpop.f32.mrb[0].mxu0
        %v2410 = vadd.f32 0.0, %v2409
        %v2411 = vpop.f32.mrb[0].mxu0
        %2412 = vmatprep.mubr.bf16.mxu0 0
        %2413 = vmatmul.mubr.bf16.gmra.mrb[0].mxu0 %v2254
        %v2414 = vpop.f32.mrb[0].mxu0
        %v2415 = vadd.f32 0.0, %v2414
        %v2416 = vpop.f32.mrb[0].mxu0
        %v2417 = vpop.f32.mrb[0].mxu0
        %v2418 = vadd.f32 0.0, %v2417
        %v2419 = vpop.f32.mrb[0].mxu0
        %2420 = vdwg.mxu0
        %2421 = vst.msk [vmem:[%s208] sm:$0xff] %vm1907, %v2295
        %2422 = vst.msk [vmem:[%s208 + $0x8] sm:$0xff] %vm1907, %v2298
        %2423 = vst.msk [vmem:[%s208 + $0x10] sm:$0xff] %vm1907, %v2303
        %2424 = vst.msk [vmem:[%s208 + $0x18] sm:$0xff] %vm1907, %v2306
        %2425 = vst.msk [vmem:[%s208 + $0x20] sm:$0xff] %vm1907, %v2311
        %2426 = vst.msk [vmem:[%s208 + $0x28] sm:$0xff] %vm1907, %v2314
        %2427 = vst.msk [vmem:[%s208 + $0x30] sm:$0xff] %vm1907, %v2319
        %2428 = vst.msk [vmem:[%s208 + $0x38] sm:$0xff] %vm1907, %v2322
        %2429 = vst.msk [vmem:[%s208 + $0x40] sm:$0xff] %vm1907, %v2327
        %2430 = vst.msk [vmem:[%s208 + $0x48] sm:$0xff] %vm1907, %v2330
        %2431 = vst.msk [vmem:[%s208 + $0x50] sm:$0xff] %vm1907, %v2335
        %2432 = vst.msk [vmem:[%s208 + $0x58] sm:$0xff] %vm1907, %v2338
        %2433 = vst.msk [vmem:[%s208 + $0x60] sm:$0xff] %vm1907, %v2343
        %2434 = vst.msk [vmem:[%s208 + $0x68] sm:$0xff] %vm1907, %v2346
        %2435 = vst.msk [vmem:[%s208 + $0x70] sm:$0xff] %vm1907, %v2351
        %2436 = vst.msk [vmem:[%s208 + $0x78] sm:$0xff] %vm1907, %v2354
        %2437 = vst.msk [vmem:[%s208 + $0x80] sm:$0xff] %vm1907, %v2359
        %2438 = vst.msk [vmem:[%s208 + $0x88] sm:$0xff] %vm1907, %v2362
        %2439 = vst.msk [vmem:[%s208 + $0x90] sm:$0xff] %vm1907, %v2367
        %2440 = vst.msk [vmem:[%s208 + $0x98] sm:$0xff] %vm1907, %v2370
        %2441 = vst.msk [vmem:[%s208 + $0xa0] sm:$0xff] %vm1907, %v2375
        %2442 = vst.msk [vmem:[%s208 + $0xa8] sm:$0xff] %vm1907, %v2378
        %2443 = vst.msk [vmem:[%s208 + $0xb0] sm:$0xff] %vm1907, %v2383
        %2444 = vst.msk [vmem:[%s208 + $0xb8] sm:$0xff] %vm1907, %v2386
        %2445 = vst.msk [vmem:[%s208 + $0xc0] sm:$0xff] %vm1907, %v2391
        %2446 = vst.msk [vmem:[%s208 + $0xc8] sm:$0xff] %vm1907, %v2394
        %2447 = vst.msk [vmem:[%s208 + $0xd0] sm:$0xff] %vm1907, %v2399
        %2448 = vst.msk [vmem:[%s208 + $0xd8] sm:$0xff] %vm1907, %v2402
        %2449 = vst.msk [vmem:[%s208 + $0xe0] sm:$0xff] %vm1907, %v2407
        %2450 = vst.msk [vmem:[%s208 + $0xe8] sm:$0xff] %vm1907, %v2410
        %2451 = vst.msk [vmem:[%s208 + $0xf0] sm:$0xff] %vm1907, %v2415
        %2452 = vst.msk [vmem:[%s208 + $0xf8] sm:$0xff] %vm1907, %v2418
        %v2453 = vsel %vm1907, %v2295, 0.0
        %v2454 = vsel %vm1907, %v2298, 0.0
        %v2455 = vadd.f32 %v2453, %v2454
        %v2456 = vsel %vm1907, %v2303, 0.0
        %v2457 = vadd.f32 %v2455, %v2456
        %v2458 = vsel %vm1907, %v2306, 0.0
        %v2459 = vadd.f32 %v2457, %v2458
        %v2460 = vsel %vm1907, %v2311, 0.0
        %v2461 = vadd.f32 %v2459, %v2460
        %v2462 = vsel %vm1907, %v2314, 0.0
        %v2463 = vadd.f32 %v2461, %v2462
        %v2464 = vsel %vm1907, %v2319, 0.0
        %v2465 = vadd.f32 %v2463, %v2464
        %v2466 = vsel %vm1907, %v2322, 0.0
        %v2467 = vadd.f32 %v2465, %v2466
        %v2468 = vsel %vm1907, %v2327, 0.0
        %v2469 = vadd.f32 %v2467, %v2468
        %v2470 = vsel %vm1907, %v2330, 0.0
        %v2471 = vadd.f32 %v2469, %v2470
        %v2472 = vsel %vm1907, %v2335, 0.0
        %v2473 = vadd.f32 %v2471, %v2472
        %v2474 = vsel %vm1907, %v2338, 0.0
        %v2475 = vadd.f32 %v2473, %v2474
        %v2476 = vsel %vm1907, %v2343, 0.0
        %v2477 = vadd.f32 %v2475, %v2476
        %v2478 = vsel %vm1907, %v2346, 0.0
        %v2479 = vadd.f32 %v2477, %v2478
        %v2480 = vsel %vm1907, %v2351, 0.0
        %v2481 = vadd.f32 %v2479, %v2480
        %v2482 = vsel %vm1907, %v2354, 0.0
        %v2483 = vadd.f32 %v2481, %v2482
        %v2484 = vsel %vm1907, %v2359, 0.0
        %v2485 = vadd.f32 %v2483, %v2484
        %v2486 = vsel %vm1907, %v2362, 0.0
        %v2487 = vadd.f32 %v2485, %v2486
        %v2488 = vsel %vm1907, %v2367, 0.0
        %v2489 = vadd.f32 %v2487, %v2488
        %v2490 = vsel %vm1907, %v2370, 0.0
        %v2491 = vadd.f32 %v2489, %v2490
        %v2492 = vsel %vm1907, %v2375, 0.0
        %v2493 = vadd.f32 %v2491, %v2492
        %v2494 = vsel %vm1907, %v2378, 0.0
        %v2495 = vadd.f32 %v2493, %v2494
        %v2496 = vsel %vm1907, %v2383, 0.0
        %v2497 = vadd.f32 %v2495, %v2496
        %v2498 = vsel %vm1907, %v2386, 0.0
        %v2499 = vadd.f32 %v2497, %v2498
        %v2500 = vsel %vm1907, %v2391, 0.0
        %v2501 = vadd.f32 %v2499, %v2500
        %v2502 = vsel %vm1907, %v2394, 0.0
        %v2503 = vadd.f32 %v2501, %v2502
        %v2504 = vsel %vm1907, %v2399, 0.0
        %v2505 = vadd.f32 %v2503, %v2504
        %v2506 = vsel %vm1907, %v2402, 0.0
        %v2507 = vadd.f32 %v2505, %v2506
        %v2508 = vsel %vm1907, %v2407, 0.0
        %v2509 = vadd.f32 %v2507, %v2508
        %v2510 = vsel %vm1907, %v2410, 0.0
        %v2511 = vadd.f32 %v2509, %v2510
        %v2512 = vsel %vm1907, %v2415, 0.0
        %v2513 = vadd.f32 %v2511, %v2512
        %v2514 = vsel %vm1907, %v2418, 0.0
        %v2515 = vadd.f32 %v2513, %v2514
        %v2516 = vrot.slane %v2515, 4
        %v2517 = vadd.f32 %v2515, %v2516
        %v2518 = vrot.slane %v2517, 2
        %v2519 = vadd.f32 %v2517, %v2518
        %v2520 = vrot.slane %v2519, 1
        %v2521 = vadd.f32 %v2519, %v2520
        %v2522 = vmul.f32 %v2295, %v2295
        %v2523 = vmul.f32 %v2298, %v2298
        %v2524 = vmul.f32 %v2303, %v2303
        %v2525 = vmul.f32 %v2306, %v2306
        %v2526 = vmul.f32 %v2311, %v2311
        %v2527 = vmul.f32 %v2314, %v2314
        %v2528 = vmul.f32 %v2319, %v2319
        %v2529 = vmul.f32 %v2322, %v2322
        %v2530 = vmul.f32 %v2327, %v2327
        %v2531 = vmul.f32 %v2330, %v2330
        %v2532 = vmul.f32 %v2335, %v2335
        %v2533 = vmul.f32 %v2338, %v2338
        %v2534 = vmul.f32 %v2343, %v2343
        %v2535 = vmul.f32 %v2346, %v2346
        %v2536 = vmul.f32 %v2351, %v2351
        %v2537 = vmul.f32 %v2354, %v2354
        %v2538 = vmul.f32 %v2359, %v2359
        %v2539 = vmul.f32 %v2362, %v2362
        %v2540 = vmul.f32 %v2367, %v2367
        %v2541 = vmul.f32 %v2370, %v2370
        %v2542 = vmul.f32 %v2375, %v2375
        %v2543 = vmul.f32 %v2378, %v2378
        %v2544 = vmul.f32 %v2383, %v2383
        %v2545 = vmul.f32 %v2386, %v2386
        %v2546 = vmul.f32 %v2391, %v2391
        %v2547 = vmul.f32 %v2394, %v2394
        %v2548 = vmul.f32 %v2399, %v2399
        %v2549 = vmul.f32 %v2402, %v2402
        %v2550 = vmul.f32 %v2407, %v2407
        %v2551 = vmul.f32 %v2410, %v2410
        %v2552 = vmul.f32 %v2415, %v2415
        %v2553 = vmul.f32 %v2418, %v2418
        %v2554 = vsel %vm1907, %v2522, 0.0
        %v2555 = vsel %vm1907, %v2523, 0.0
        %v2556 = vadd.f32 %v2554, %v2555
        %v2557 = vsel %vm1907, %v2524, 0.0
        %v2558 = vadd.f32 %v2556, %v2557
        %v2559 = vsel %vm1907, %v2525, 0.0
        %v2560 = vadd.f32 %v2558, %v2559
        %v2561 = vsel %vm1907, %v2526, 0.0
        %v2562 = vadd.f32 %v2560, %v2561
        %v2563 = vsel %vm1907, %v2527, 0.0
        %v2564 = vadd.f32 %v2562, %v2563
        %v2565 = vsel %vm1907, %v2528, 0.0
        %v2566 = vadd.f32 %v2564, %v2565
        %v2567 = vsel %vm1907, %v2529, 0.0
        %v2568 = vadd.f32 %v2566, %v2567
        %v2569 = vsel %vm1907, %v2530, 0.0
        %v2570 = vadd.f32 %v2568, %v2569
        %v2571 = vsel %vm1907, %v2531, 0.0
        %v2572 = vadd.f32 %v2570, %v2571
        %v2573 = vsel %vm1907, %v2532, 0.0
        %v2574 = vadd.f32 %v2572, %v2573
        %v2575 = vsel %vm1907, %v2533, 0.0
        %v2576 = vadd.f32 %v2574, %v2575
        %v2577 = vsel %vm1907, %v2534, 0.0
        %v2578 = vadd.f32 %v2576, %v2577
        %v2579 = vsel %vm1907, %v2535, 0.0
        %v2580 = vadd.f32 %v2578, %v2579
        %v2581 = vsel %vm1907, %v2536, 0.0
        %v2582 = vadd.f32 %v2580, %v2581
        %v2583 = vsel %vm1907, %v2537, 0.0
        %v2584 = vadd.f32 %v2582, %v2583
        %v2585 = vsel %vm1907, %v2538, 0.0
        %v2586 = vadd.f32 %v2584, %v2585
        %v2587 = vsel %vm1907, %v2539, 0.0
        %v2588 = vadd.f32 %v2586, %v2587
        %v2589 = vsel %vm1907, %v2540, 0.0
        %v2590 = vadd.f32 %v2588, %v2589
        %v2591 = vsel %vm1907, %v2541, 0.0
        %v2592 = vadd.f32 %v2590, %v2591
        %v2593 = vsel %vm1907, %v2542, 0.0
        %v2594 = vadd.f32 %v2592, %v2593
        %v2595 = vsel %vm1907, %v2543, 0.0
        %v2596 = vadd.f32 %v2594, %v2595
        %v2597 = vsel %vm1907, %v2544, 0.0
        %v2598 = vadd.f32 %v2596, %v2597
        %v2599 = vsel %vm1907, %v2545, 0.0
        %v2600 = vadd.f32 %v2598, %v2599
        %v2601 = vsel %vm1907, %v2546, 0.0
        %v2602 = vadd.f32 %v2600, %v2601
        %v2603 = vsel %vm1907, %v2547, 0.0
        %v2604 = vadd.f32 %v2602, %v2603
        %v2605 = vsel %vm1907, %v2548, 0.0
        %v2606 = vadd.f32 %v2604, %v2605
        %v2607 = vsel %vm1907, %v2549, 0.0
        %v2608 = vadd.f32 %v2606, %v2607
        %v2609 = vsel %vm1907, %v2550, 0.0
        %v2610 = vadd.f32 %v2608, %v2609
        %v2611 = vsel %vm1907, %v2551, 0.0
        %v2612 = vadd.f32 %v2610, %v2611
        %v2613 = vsel %vm1907, %v2552, 0.0
        %v2614 = vadd.f32 %v2612, %v2613
        %v2615 = vsel %vm1907, %v2553, 0.0
        %v2616 = vadd.f32 %v2614, %v2615
        %v2617 = vrot.slane %v2616, 4
        %v2618 = vadd.f32 %v2616, %v2617
        %v2619 = vrot.slane %v2618, 2
        %v2620 = vadd.f32 %v2618, %v2619
        %v2621 = vrot.slane %v2620, 1
        %v2622 = vadd.f32 %v2620, %v2621
        %v2623 = vsel %vm304, %v2521, %v2622
        %vm2624 = vcmask 25600
        %2625 = vst.msk [vmem:[%s198] sm:$0x3] %vm2624, %v2623
        %p2626 = scmp.lt.s32.totalorder %s19, 1
        %s2627 = scalar_select %p2626, %s19, 1
        %s2628 = smul.addr %s2627, 32
        %s2629 = smul.addr %s2628, 8
        %s2630 = scalar_lea.vmem %s3, %s2629
        %s2631 = sand.u32 %s121, 1
        %s2632 = scalar_lea.sflag [#allocation3], %s2631
        %s2633 = sand.u32 %s121, 1
        %s2634 = smul.addr %s2633, 2
        %s2635 = scalar_lea.vmem [#allocation2], %s2634
        // Predicated region
        $region33: #{tpu_custom_call.1} parent=31 // pred_check
          %p2636 = pneg %p105
        $region34: #{tpu_custom_call.1} parent=31 // pred_check_branch
          %2638 = sbr.rel (%p2636) target = $region36
        $region35: #{tpu_custom_call.1} parent=31 // pred_region
          _
        $region36: #{tpu_custom_call.1} parent=31 // pred_fallthru
          _
        // Predicated region
        $region37: #{tpu_custom_call.1} parent=31 // pred_check
          %p2639 = pneg %p131
        $region38: #{tpu_custom_call.1} parent=31 // pred_check_branch
          %2641 = sbr.rel (%p2639) target = $region40
        $region39: #{tpu_custom_call.1} parent=31 // pred_region
          %s2643 = ssub.s32 32, 32
          %2644 = vsyncadd %s2632, %s2643
          %s2645 = smul.addr %s19, 32
          %s2646 = scalar_lea.hbm %s4, %s2645
          %s2648 = sshll.u32 %s2635, 4
          %s2649 = int_to_ptr.vmem [resolvable:$true] %s2648
          %2651 = dma.vmem_to_hbm [thread:$0]  %s2649, 32, %s2646, %s2632
        $region40: #{tpu_custom_call.1} parent=31 // pred_fallthru
          _
      $region32: #{tpu_custom_call.1} parent=5 // pred_fallthru
        _
      %p2652 = scmp.le.s32.totalorder 2, %s14
      // Predicated region
      $region41: #{tpu_custom_call.1} parent=5 // pred_check
        %p2653 = pneg %p2652
      $region42: #{tpu_custom_call.1} parent=5 // pred_check_branch
        %2655 = sbr.rel (%p2653) target = $region44
      $region43: #{tpu_custom_call.1} parent=5 // pred_region
        %s2656 = ssub.s32 %s14, 2
        // Predicated region
        $region45: #{tpu_custom_call.1} parent=43 // pred_check
          %p2657 = pneg %p111
        $region46: #{tpu_custom_call.1} parent=43 // pred_check_branch
          %2659 = sbr.rel (%p2657) target = $region48
        $region47: #{tpu_custom_call.1} parent=43 // pred_region
          %p2660 = scmp.lt.s32.totalorder %s20, 1
          %s2661 = scalar_select %p2660, %s20, 1
          %s2662 = smul.addr %s2661, 32
          %s2663 = smul.addr %s2662, 8
          %s2664 = scalar_lea.vmem %s3, %s2663
        $region48: #{tpu_custom_call.1} parent=43 // pred_fallthru
          _
        // Predicated region
        $region49: #{tpu_custom_call.1} parent=43 // pred_check
          %p2665 = pneg %p137
        $region50: #{tpu_custom_call.1} parent=43 // pred_check_branch
          %2667 = sbr.rel (%p2665) target = $region52
        $region51: #{tpu_custom_call.1} parent=43 // pred_region
          %s2668 = sand.u32 %s122, 1
          %s2669 = scalar_lea.sflag [#allocation3], %s2668
          %s2670 = sand.u32 %s122, 1
          %s2671 = smul.addr %s2670, 2
          %s2672 = scalar_lea.vmem [#allocation2], %s2671
          %2673 = dma.done %s2669, 32
        $region52: #{tpu_custom_call.1} parent=43 // pred_fallthru
          _
      $region44: #{tpu_custom_call.1} parent=5 // pred_fallthru
        _
    $region6: #{tpu_custom_call.1} parent=1 // loop_footer
      %s18 = sadd.s32 1, %s14
    $region7: #{tpu_custom_call.1} parent=1 // loop_footer_branch
      %13 = sbr.rel target = $region3
    $region8: #{tpu_custom_call.1} parent=1 // loop_exit
      _
    %2674 = vsyncpa [#allocation3], 1
    %s2675 = scalar_lea.sflag [#allocation3], 1
    %2676 = vsyncpa %s2675, 1

</llo_original>
